<compile_context>
chip_gen: v5e
topology: v5e:2x2
jax: 0.10.0
libtpu: 0.0.40
codegen_flags: <defaults>
</compile_context>

<pallas_src>
import jax
import jax.numpy as jnp
from jax.experimental import pallas as pl
from jax.experimental.pallas import tpu as pltpu

SELU_ALPHA = 1.6732632423543772
SELU_SCALE = 1.0507009873554805
BN_EPS = 1e-5
LANE = 128


def _round_up(a, m):
    return ((a + m - 1) // m) * m


def _selu_core_bf16(x):
    """SELU without the outer scale (folded into the next layer's weights),
    cast once to bf16 for the following MXU matmul."""
    neg = SELU_ALPHA * (jnp.exp(jnp.minimum(x, 0.0)) - 1.0)
    return jnp.where(x > 0, x, neg).astype(jnp.bfloat16)


# ---------------------------------------------------------------------------
# Kernel
# ---------------------------------------------------------------------------
def _make_mlp_kernel(n_layers):
    """Fused forward pass over one (TM, in_dim) batch tile.

    refs = (x_ref, w_1..w_n, bias_pack_ref, out_ref); weights are bf16, bias pack f32.
    """

    def kernel(*refs):
        x_ref = refs[0]
        w_refs = refs[1:1 + n_layers]
        b_ref = refs[1 + n_layers]
        out_ref = refs[2 + n_layers]

        def dense(h_bf16, w_ref, row):
            width = w_ref.shape[1]
            y = jnp.dot(h_bf16, w_ref[...], preferred_element_type=jnp.float32)
            return y + b_ref[row:row + 1, :width]   # (1, width) broadcast over TM

        h = x_ref[...].astype(jnp.bfloat16)          # (TM, in_dim)
        for i in range(n_layers - 1):
            # Linear + BN(folded) -> SELU (scale folded forward) -> Dropout(eval = identity)
            h = _selu_core_bf16(dense(h, w_refs[i], i))
        logits = dense(h, w_refs[-1], n_layers - 1)  # (TM, 128) padded logits, f32
        # Exact sigmoid: exp on EUP, exact reciprocal (user-visible probabilities).
        probs = pl.reciprocal(1.0 + jnp.exp(-logits), approx=False)
        # Store only the real out_dim columns -> 8x fewer HBM output bytes.
        out_ref[...] = probs[:, :out_ref.shape[1]]

    return kernel


# ---------------------------------------------------------------------------
# Wrapper
# ---------------------------------------------------------------------------
def _pick_block_batch(batch):
    """Big tiles (up to 1024 rows) to amortize the ~0.35us/step overhead, but keep
    >= 2 grid steps when the batch allows it so v7x's two TensorCores both get work."""
    if batch >= 32:
        half = _round_up((batch + 1) // 2, 16)
        return min(1024, half)
    return _round_up(max(batch, 1), 16)


def _vmem_limit_bytes(weights, bias_pack, tm, in_dim, out_dim):
    w_bytes = sum(w.size * w.dtype.itemsize for w in weights)
    b_bytes = bias_pack.size * bias_pack.dtype.itemsize
    x_bytes = tm * in_dim * 4
    o_bytes = tm * max(out_dim, LANE) * 4                        # VMEM tile lane-pads to 128
    act_bytes = tm * sum(int(w.shape[1]) for w in weights) * 6   # f32 pre-act + bf16 activation
    total = 2 * (w_bytes + b_bytes + x_bytes + o_bytes) + act_bytes  # 2x: pipeline buffers
    return int(min(max(total * 1.5, 8 << 20), 128 << 20))


def multi_label_forward(x, prep, block_batch=None):
    """x: [B, input_dim] float32.  prep: dict from prepare_params()."""
    weights = prep["weights"]            # list of bf16 [in_padded, out_padded]
    bias_pack = prep["bias"]             # f32 [8, max_width]
    out_dim = prep["out_dim"]
    n_layers = len(weights)

    in_dim = weights[0].shape[0]
    batch = x.shape[0]

    tm = block_batch if block_batch is not None else _pick_block_batch(batch)
    tm = _round_up(max(tm, 16), 16)      # bf16 LHS packs 16 rows / sublane group
    b_pad = _round_up(batch, tm)
    if b_pad != batch:
        x = jnp.pad(x, ((0, b_pad - batch), (0, 0)))
    grid = (b_pad // tm,)

    # x / out tiled over batch; weights & bias pack VMEM-resident (constant index_map).
    in_specs = [pl.BlockSpec((tm, in_dim), lambda i: (i, 0))]
    for w in weights:
        in_specs.append(pl.BlockSpec(w.shape, lambda i: (0, 0)))
    in_specs.append(pl.BlockSpec(bias_pack.shape, lambda i: (0, 0)))
    # Unpadded output: last block dim == full array dim (legal), 8x fewer HBM bytes.
    out_spec = pl.BlockSpec((tm, out_dim), lambda i: (i, 0))

    out = pl.pallas_call(
        _make_mlp_kernel(n_layers),
        out_shape=jax.ShapeDtypeStruct((b_pad, out_dim), jnp.float32),
        grid=grid,
        in_specs=in_specs,
        out_specs=out_spec,
        compiler_params=pltpu.CompilerParams(
            dimension_semantics=("parallel",),   # batch tiles are independent
            vmem_limit_bytes=_vmem_limit_bytes(weights, bias_pack, tm, in_dim, out_dim)),
    )(x, *weights, bias_pack)

    return out[:batch, :]


# ---------------------------------------------------------------------------
# Parameters: PyTorch-style init, then fold / pad / pack for the kernel
# ---------------------------------------------------------------------------
def init_raw_params(key, input_dim, output_dim, hidden_dims):
    """Deterministic PyTorch-style params (Linear uniform(+-1/sqrt(fan_in)), BN stats)."""
    layers = []
    dims = [input_dim] + list(hidden_dims)
    for i in range(len(hidden_dims)):
        fan_in, fan_out = dims[i], dims[i + 1]
        key, kw, kb, kg, kbt, km, kv = jax.random.split(key, 7)
        bound = 1.0 / (fan_in ** 0.5)
        layers.append(dict(
            w=jax.random.uniform(kw, (fan_in, fan_out), jnp.float32, -bound, bound),
            b=jax.random.uniform(kb, (fan_out,), jnp.float32, -bound, bound),
            gamma=1.0 + 0.1 * jax.random.normal(kg, (fan_out,), jnp.float32),
            beta=0.1 * jax.random.normal(kbt, (fan_out,), jnp.float32),
            mean=0.05 * jax.random.normal(km, (fan_out,), jnp.float32),
            var=1.0 + 0.1 * jax.random.uniform(kv, (fan_out,), jnp.float32)))
    fan_in = dims[-1]
    key, kw, kb = jax.random.split(key, 3)
    bound = 1.0 / (fan_in ** 0.5)
    layers.append(dict(
        w=jax.random.uniform(kw, (fan_in, output_dim), jnp.float32, -bound, bound),
        b=jax.random.uniform(kb, (output_dim,), jnp.float32, -bound, bound)))
    return layers


def prepare_params(raw, lane=LANE):
    """Fold eval-mode BN into Linear, fold SELU_SCALE into the next layer's weights,
    pad narrow feature dims to a lane multiple, cast weights to bf16, pack biases."""
    folded = []
    for layer in raw[:-1]:
        scale = layer["gamma"] * jax.lax.rsqrt(layer["var"] + BN_EPS)
        w = layer["w"] * scale[None, :]
        b = (layer["b"] - layer["mean"]) * scale + layer["beta"]
        folded.append([w, b])
    folded.append([raw[-1]["w"], raw[-1]["b"]])

    # scale * f(x) @ W == f(x) @ (scale * W): fold the SELU output scale of layer i
    # into layer i+1's weight (every layer after the first consumes a SELU output).
    for i in range(1, len(folded)):
        folded[i][0] = folded[i][0] * SELU_SCALE

    out_dim = folded[-1][0].shape[1]

    weights, biases = [], []
    prev_width = folded[0][0].shape[0]        # input_dim (x itself is NOT padded)
    for (w, b) in folded:
        in_f, out_f = w.shape
        out_padded = _round_up(out_f, lane)
        w = jnp.pad(w, ((0, prev_width - in_f), (0, out_padded - out_f)))
        b = jnp.pad(b, (0, out_padded - out_f))
        weights.append(w.astype(jnp.bfloat16))
        biases.append(b.astype(jnp.float32))
        prev_width = out_padded

    max_w = max(int(b.shape[0]) for b in biases)
    n_rows = _round_up(len(biases), 8)
    bias_pack = jnp.zeros((n_rows, max_w), jnp.float32)
    for i, b in enumerate(biases):
        bias_pack = bias_pack.at[i, :b.shape[0]].set(b)

    return dict(weights=weights, bias=bias_pack, out_dim=out_dim)


# ---------------------------------------------------------------------------
# Pure-JAX reference with the exact same numerics (folded params, bf16 matmul inputs)
# ---------------------------------------------------------------------------
def reference_forward(x, prep):
    weights, bias_pack, out_dim = prep["weights"], prep["bias"], prep["out_dim"]
    h = x.astype(jnp.bfloat16)
    for i, w in enumerate(weights):
        y = jnp.dot(h, w, preferred_element_type=jnp.float32)
        y = y + bias_pack[i:i + 1, :w.shape[1]]
        if i < len(weights) - 1:
            neg = SELU_ALPHA * (jnp.exp(jnp.minimum(y, 0.0)) - 1.0)
            h = jnp.where(y > 0, y, neg).astype(jnp.bfloat16)
        else:
            out = jax.nn.sigmoid(y)
    return out[:, :out_dim]


if __name__ == "__main__":
    key = jax.random.PRNGKey(0)
    batch = 40
    input_dim = 32
    output_dim = 16
    hidden_dims = [512, 256, 128, 64]

    kx, kp = jax.random.split(key)
    x = jax.random.normal(kx, (batch, input_dim), jnp.float32)
    raw = init_raw_params(kp, input_dim, output_dim, hidden_dims)
    prep = prepare_params(raw)

    # Default path: tm = 32 (ceil(40/2) rounded to 16), grid = (2,), batch padded 40->64.
    out = jax.block_until_ready(multi_label_forward(x, prep))
    # Explicit small-tile path: tm = 16 -> grid = (3,), batch padded 40->48.
    out_tiled = jax.block_until_ready(multi_label_forward(x, prep, block_batch=16))

    ref = reference_forward(x, prep)
    assert out.shape == (batch, output_dim)
    assert out_tiled.shape == (batch, output_dim)
    err = float(jnp.max(jnp.abs(out - ref)))
    err_t = float(jnp.max(jnp.abs(out_tiled - ref)))
    assert err < 5e-3, f"mismatch vs reference (default tiling): {err}"
    assert err_t < 5e-3, f"mismatch vs reference (tm=16): {err_t}"
    print("KERNEL_OK")
</pallas_src>

<mosaic_0001>
module attributes {stable_mosaic.version = 11 : i64} {
  func.func @kernel(%arg0: i32, %arg1: memref<32x32xf32, #tpu.memory_space<vmem>>, %arg2: memref<32x512xbf16, #tpu.memory_space<vmem>>, %arg3: memref<512x256xbf16, #tpu.memory_space<vmem>>, %arg4: memref<256x128xbf16, #tpu.memory_space<vmem>>, %arg5: memref<128x128xbf16, #tpu.memory_space<vmem>>, %arg6: memref<128x128xbf16, #tpu.memory_space<vmem>>, %arg7: memref<8x512xf32, #tpu.memory_space<vmem>>, %arg8: memref<32x16xf32, #tpu.memory_space<vmem>>) attributes {dimension_semantics = [#tpu.dimension_semantics<parallel>], iteration_bounds = array<i64: 2>, scalar_prefetch = 0 : i64, scratch_operands = 0 : i64, tpu.core_type = #tpu.core_type<tc>, window_params = [{transform_indices = @transform_0, window_bounds = array<i64: 32, 32>}, {pipeline_mode = #tpu.pipeline_mode<synchronous>, transform_indices = @transform_1, window_bounds = array<i64: 32, 512>}, {pipeline_mode = #tpu.pipeline_mode<synchronous>, transform_indices = @transform_2, window_bounds = array<i64: 512, 256>}, {pipeline_mode = #tpu.pipeline_mode<synchronous>, transform_indices = @transform_3, window_bounds = array<i64: 256, 128>}, {pipeline_mode = #tpu.pipeline_mode<synchronous>, transform_indices = @transform_4, window_bounds = array<i64: 128, 128>}, {pipeline_mode = #tpu.pipeline_mode<synchronous>, transform_indices = @transform_5, window_bounds = array<i64: 128, 128>}, {pipeline_mode = #tpu.pipeline_mode<synchronous>, transform_indices = @transform_6, window_bounds = array<i64: 8, 512>}, {transform_indices = @transform_7, window_bounds = array<i64: 32, 16>}]} {
    %c0 = arith.constant 0 : index
    %c0_0 = arith.constant 0 : index
    %0 = vector.load %arg1[%c0, %c0_0] : memref<32x32xf32, #tpu.memory_space<vmem>>, vector<32x32xf32>
    %1 = arith.truncf %0 : vector<32x32xf32> to vector<32x32xbf16>
    %c0_1 = arith.constant 0 : index
    %c0_2 = arith.constant 0 : index
    %2 = vector.load %arg2[%c0_1, %c0_2] : memref<32x512xbf16, #tpu.memory_space<vmem>>, vector<32x512xbf16>
    %cst = arith.constant dense<0.000000e+00> : vector<32x512xf32>
    %3 = tpu.matmul %1, %2, %cst {dimension_numbers = #tpu.dot_dimension_numbers<[1], [0], [0], [1], [0, 0, 1, 1], [], []>} : vector<32x32xbf16>, vector<32x512xbf16>, vector<32x512xf32> -> vector<32x512xf32>
    %c0_3 = arith.constant 0 : index
    %c0_4 = arith.constant 0 : index
    %4 = vector.load %arg7[%c0_3, %c0_4] : memref<8x512xf32, #tpu.memory_space<vmem>>, vector<1x512xf32>
    %5 = vector.broadcast %4 : vector<1x512xf32> to vector<32x512xf32>
    %6 = arith.addf %3, %5 : vector<32x512xf32>
    %cst_5 = arith.constant 0.000000e+00 : f32
    %7 = vector.broadcast %cst_5 : f32 to vector<32x512xf32>
    %8 = arith.minimumf %6, %7 : vector<32x512xf32>
    %9 = math.exp %8 : vector<32x512xf32>
    %cst_6 = arith.constant 1.000000e+00 : f32
    %10 = vector.broadcast %cst_6 : f32 to vector<32x512xf32>
    %11 = arith.subf %9, %10 : vector<32x512xf32>
    %cst_7 = arith.constant 1.67326319 : f32
    %12 = vector.broadcast %cst_7 : f32 to vector<32x512xf32>
    %13 = arith.mulf %12, %11 : vector<32x512xf32>
    %cst_8 = arith.constant 0.000000e+00 : f32
    %14 = vector.broadcast %cst_8 : f32 to vector<32x512xf32>
    %15 = arith.cmpf ogt, %6, %14 : vector<32x512xf32>
    %16 = arith.select %15, %6, %13 : vector<32x512xi1>, vector<32x512xf32>
    %17 = arith.truncf %16 : vector<32x512xf32> to vector<32x512xbf16>
    %c0_9 = arith.constant 0 : index
    %c0_10 = arith.constant 0 : index
    %18 = vector.load %arg3[%c0_9, %c0_10] : memref<512x256xbf16, #tpu.memory_space<vmem>>, vector<512x256xbf16>
    %cst_11 = arith.constant dense<0.000000e+00> : vector<32x256xf32>
    %19 = tpu.matmul %17, %18, %cst_11 {dimension_numbers = #tpu.dot_dimension_numbers<[1], [0], [0], [1], [0, 0, 1, 1], [], []>} : vector<32x512xbf16>, vector<512x256xbf16>, vector<32x256xf32> -> vector<32x256xf32>
    %c1 = arith.constant 1 : index
    %c0_12 = arith.constant 0 : index
    %20 = vector.load %arg7[%c1, %c0_12] : memref<8x512xf32, #tpu.memory_space<vmem>>, vector<1x256xf32>
    %21 = vector.broadcast %20 : vector<1x256xf32> to vector<32x256xf32>
    %22 = arith.addf %19, %21 : vector<32x256xf32>
    %cst_13 = arith.constant 0.000000e+00 : f32
    %23 = vector.broadcast %cst_13 : f32 to vector<32x256xf32>
    %24 = arith.minimumf %22, %23 : vector<32x256xf32>
    %25 = math.exp %24 : vector<32x256xf32>
    %cst_14 = arith.constant 1.000000e+00 : f32
    %26 = vector.broadcast %cst_14 : f32 to vector<32x256xf32>
    %27 = arith.subf %25, %26 : vector<32x256xf32>
    %cst_15 = arith.constant 1.67326319 : f32
    %28 = vector.broadcast %cst_15 : f32 to vector<32x256xf32>
    %29 = arith.mulf %28, %27 : vector<32x256xf32>
    %cst_16 = arith.constant 0.000000e+00 : f32
    %30 = vector.broadcast %cst_16 : f32 to vector<32x256xf32>
    %31 = arith.cmpf ogt, %22, %30 : vector<32x256xf32>
    %32 = arith.select %31, %22, %29 : vector<32x256xi1>, vector<32x256xf32>
    %33 = arith.truncf %32 : vector<32x256xf32> to vector<32x256xbf16>
    %c0_17 = arith.constant 0 : index
    %c0_18 = arith.constant 0 : index
    %34 = vector.load %arg4[%c0_17, %c0_18] : memref<256x128xbf16, #tpu.memory_space<vmem>>, vector<256x128xbf16>
    %cst_19 = arith.constant dense<0.000000e+00> : vector<32x128xf32>
    %35 = tpu.matmul %33, %34, %cst_19 {dimension_numbers = #tpu.dot_dimension_numbers<[1], [0], [0], [1], [0, 0, 1, 1], [], []>} : vector<32x256xbf16>, vector<256x128xbf16>, vector<32x128xf32> -> vector<32x128xf32>
    %c2 = arith.constant 2 : index
    %c0_20 = arith.constant 0 : index
    %36 = vector.load %arg7[%c2, %c0_20] : memref<8x512xf32, #tpu.memory_space<vmem>>, vector<1x128xf32>
    %37 = vector.broadcast %36 : vector<1x128xf32> to vector<32x128xf32>
    %38 = arith.addf %35, %37 : vector<32x128xf32>
    %cst_21 = arith.constant 0.000000e+00 : f32
    %39 = vector.broadcast %cst_21 : f32 to vector<32x128xf32>
    %40 = arith.minimumf %38, %39 : vector<32x128xf32>
    %41 = math.exp %40 : vector<32x128xf32>
    %cst_22 = arith.constant 1.000000e+00 : f32
    %42 = vector.broadcast %cst_22 : f32 to vector<32x128xf32>
    %43 = arith.subf %41, %42 : vector<32x128xf32>
    %cst_23 = arith.constant 1.67326319 : f32
    %44 = vector.broadcast %cst_23 : f32 to vector<32x128xf32>
    %45 = arith.mulf %44, %43 : vector<32x128xf32>
    %cst_24 = arith.constant 0.000000e+00 : f32
    %46 = vector.broadcast %cst_24 : f32 to vector<32x128xf32>
    %47 = arith.cmpf ogt, %38, %46 : vector<32x128xf32>
    %48 = arith.select %47, %38, %45 : vector<32x128xi1>, vector<32x128xf32>
    %49 = arith.truncf %48 : vector<32x128xf32> to vector<32x128xbf16>
    %c0_25 = arith.constant 0 : index
    %c0_26 = arith.constant 0 : index
    %50 = vector.load %arg5[%c0_25, %c0_26] : memref<128x128xbf16, #tpu.memory_space<vmem>>, vector<128x128xbf16>
    %cst_27 = arith.constant dense<0.000000e+00> : vector<32x128xf32>
    %51 = tpu.matmul %49, %50, %cst_27 {dimension_numbers = #tpu.dot_dimension_numbers<[1], [0], [0], [1], [0, 0, 1, 1], [], []>} : vector<32x128xbf16>, vector<128x128xbf16>, vector<32x128xf32> -> vector<32x128xf32>
    %c3 = arith.constant 3 : index
    %c0_28 = arith.constant 0 : index
    %52 = vector.load %arg7[%c3, %c0_28] : memref<8x512xf32, #tpu.memory_space<vmem>>, vector<1x128xf32>
    %53 = vector.broadcast %52 : vector<1x128xf32> to vector<32x128xf32>
    %54 = arith.addf %51, %53 : vector<32x128xf32>
    %cst_29 = arith.constant 0.000000e+00 : f32
    %55 = vector.broadcast %cst_29 : f32 to vector<32x128xf32>
    %56 = arith.minimumf %54, %55 : vector<32x128xf32>
    %57 = math.exp %56 : vector<32x128xf32>
    %cst_30 = arith.constant 1.000000e+00 : f32
    %58 = vector.broadcast %cst_30 : f32 to vector<32x128xf32>
    %59 = arith.subf %57, %58 : vector<32x128xf32>
    %cst_31 = arith.constant 1.67326319 : f32
    %60 = vector.broadcast %cst_31 : f32 to vector<32x128xf32>
    %61 = arith.mulf %60, %59 : vector<32x128xf32>
    %cst_32 = arith.constant 0.000000e+00 : f32
    %62 = vector.broadcast %cst_32 : f32 to vector<32x128xf32>
    %63 = arith.cmpf ogt, %54, %62 : vector<32x128xf32>
    %64 = arith.select %63, %54, %61 : vector<32x128xi1>, vector<32x128xf32>
    %65 = arith.truncf %64 : vector<32x128xf32> to vector<32x128xbf16>
    %c0_33 = arith.constant 0 : index
    %c0_34 = arith.constant 0 : index
    %66 = vector.load %arg6[%c0_33, %c0_34] : memref<128x128xbf16, #tpu.memory_space<vmem>>, vector<128x128xbf16>
    %cst_35 = arith.constant dense<0.000000e+00> : vector<32x128xf32>
    %67 = tpu.matmul %65, %66, %cst_35 {dimension_numbers = #tpu.dot_dimension_numbers<[1], [0], [0], [1], [0, 0, 1, 1], [], []>} : vector<32x128xbf16>, vector<128x128xbf16>, vector<32x128xf32> -> vector<32x128xf32>
    %c4 = arith.constant 4 : index
    %c0_36 = arith.constant 0 : index
    %68 = vector.load %arg7[%c4, %c0_36] : memref<8x512xf32, #tpu.memory_space<vmem>>, vector<1x128xf32>
    %69 = vector.broadcast %68 : vector<1x128xf32> to vector<32x128xf32>
    %70 = arith.addf %67, %69 : vector<32x128xf32>
    %cst_37 = arith.constant 0.000000e+00 : f32
    %71 = vector.broadcast %cst_37 : f32 to vector<32x128xf32>
    %72 = arith.subf %71, %70 : vector<32x128xf32>
    %73 = math.exp %72 : vector<32x128xf32>
    %cst_38 = arith.constant 1.000000e+00 : f32
    %74 = vector.broadcast %cst_38 : f32 to vector<32x128xf32>
    %75 = arith.addf %74, %73 : vector<32x128xf32>
    %76 = tpu.reciprocal %75 : vector<32x128xf32> -> vector<32x128xf32>
    %77 = vector.extract_strided_slice %76 {offsets = [0, 0], sizes = [32, 16], strides = [1, 1]} : vector<32x128xf32> to vector<32x16xf32>
    %c0_39 = arith.constant 0 : index
    %c0_40 = arith.constant 0 : index
    %78 = vector.load %arg8[%c0_39, %c0_40] : memref<32x16xf32, #tpu.memory_space<vmem>>, vector<32x16xf32>
    tpu.vector_store %arg8[%c0_39, %c0_40], %77 {strides = array<i32>} : memref<32x16xf32, #tpu.memory_space<vmem>>, vector<32x16xf32>,
    return
  }
  func.func @transform_0(%arg0: i32) -> (i32, i32) {
    %c0_i32 = arith.constant 0 : i32
    %c0_i32_0 = arith.constant 0 : i32
    return %arg0, %c0_i32 : i32, i32
  }
  func.func @transform_1(%arg0: i32) -> (i32, i32) {
    %c0_i32 = arith.constant 0 : i32
    %c0_i32_0 = arith.constant 0 : i32
    %c0_i32_1 = arith.constant 0 : i32
    return %c0_i32, %c0_i32_0 : i32, i32
  }
  func.func @transform_2(%arg0: i32) -> (i32, i32) {
    %c0_i32 = arith.constant 0 : i32
    %c0_i32_0 = arith.constant 0 : i32
    %c0_i32_1 = arith.constant 0 : i32
    return %c0_i32, %c0_i32_0 : i32, i32
  }
  func.func @transform_3(%arg0: i32) -> (i32, i32) {
    %c0_i32 = arith.constant 0 : i32
    %c0_i32_0 = arith.constant 0 : i32
    %c0_i32_1 = arith.constant 0 : i32
    return %c0_i32, %c0_i32_0 : i32, i32
  }
  func.func @transform_4(%arg0: i32) -> (i32, i32) {
    %c0_i32 = arith.constant 0 : i32
    %c0_i32_0 = arith.constant 0 : i32
    %c0_i32_1 = arith.constant 0 : i32
    return %c0_i32, %c0_i32_0 : i32, i32
  }
  func.func @transform_5(%arg0: i32) -> (i32, i32) {
    %c0_i32 = arith.constant 0 : i32
    %c0_i32_0 = arith.constant 0 : i32
    %c0_i32_1 = arith.constant 0 : i32
    return %c0_i32, %c0_i32_0 : i32, i32
  }
  func.func @transform_6(%arg0: i32) -> (i32, i32) {
    %c0_i32 = arith.constant 0 : i32
    %c0_i32_0 = arith.constant 0 : i32
    %c0_i32_1 = arith.constant 0 : i32
    return %c0_i32, %c0_i32_0 : i32, i32
  }
  func.func @transform_7(%arg0: i32) -> (i32, i32) {
    %c0_i32 = arith.constant 0 : i32
    %c0_i32_0 = arith.constant 0 : i32
    return %arg0, %c0_i32 : i32, i32
  }
}

</mosaic_0001>

<llo_original>
// kernel: tpu_custom_call.1
$region0: #{tpu_custom_call.1}
  #allocation0 [shape = 'u32[]', space=smem, size = 0x4, offset = 0x4, fixed_abs, tag = 'smem constant byte address 0x4 - core index']
  #allocation1 [shape = 'u32[72,128]{1,0:T(1,128)}', space=vmem, size = 0x9000, scoped, tag = 'internal scratch']
  %s0 = inlined_call_operand.vmem [shape: f32[64,32], index: 0, kind: input, shape index: {}]
  %s1 = inlined_call_operand.vmem [shape: bf16[32,512], index: 1, kind: input, shape index: {}]
  %s2 = inlined_call_operand.hbm [shape: bf16[512,256], index: 2, kind: input, shape index: {}]
  %s3 = inlined_call_operand.hbm [shape: bf16[256,128], index: 3, kind: input, shape index: {}]
  %s4 = inlined_call_operand.hbm [shape: bf16[128,128], index: 4, kind: input, shape index: {}]
  %s5 = inlined_call_operand.hbm [shape: bf16[128,128], index: 5, kind: input, shape index: {}]
  %s6 = inlined_call_operand.vmem [shape: f32[8,512], index: 6, kind: input, shape index: {}]
  %s7 = inlined_call_operand.vmem [shape: f32[64,16], index: 7, kind: output, shape index: {}]
  %s8 = sld [smem:[#allocation0]]
  $region77: #{tpu_custom_call.1} parent=0
    _
  %s10 = ssub.s32 1, %s8
  %s11 = scalar_select 0, %s10, %s8
  $region1: #{tpu_custom_call.1} parent=0
    #allocation2 [shape = 'u8[262144]{0}', space=vmem, size = 0x40000, scoped, tag = 'input window, operand 2, single buffered']
    #allocation3 [shape = 's32[2]{0}', space=sflag, size = 0x8, scoped, tag = 'scoped memory for tpu_custom_call.1']
    #allocation4 [shape = 'u8[65536]{0}', space=vmem, size = 0x10000, scoped, tag = 'input window, operand 3, single buffered']
    #allocation5 [shape = 's32[1]{0}', space=sflag, size = 0x4, scoped, tag = 'scoped memory for tpu_custom_call.1']
    #allocation6 [shape = 'u8[32768]{0}', space=vmem, size = 0x8000, scoped, tag = 'input window, operand 4, single buffered']
    #allocation7 [shape = 'u8[32768]{0}', space=vmem, size = 0x8000, scoped, tag = 'input window, operand 5, single buffered']
    #allocation8 [shape = 's32[1]{0}', space=sflag, size = 0x4, scoped, tag = 'scoped memory for tpu_custom_call.1']
    %12 = vsyncpa [#allocation3], 0
    %13 = vsyncpa [#allocation5], 0
    %14 = vsyncpa [#allocation8], 0
    loop: start=0, step=1, limit=4
    $region2: #{tpu_custom_call.1} parent=1 // loop_pre_header
      _
    $region3: #{tpu_custom_call.1} parent=1 // loop_header
      %s16 = sphi 0, %s20
      %p17 = scmp.ge.s32.totalorder %s16, 4
      %s26 = sphi 0, %s28
      %s29 = sphi 0, %s26
      %s30 = sphi 0, %s29
      %s46 = sphi 0, %s30
      %s50 = sphi 0, %s50
      %s52 = sphi 0, %s50
      %s53 = sphi 0, %s52
      %s67 = sphi 0, %s53
      %s71 = sphi 0, %s71
      %s73 = sphi 0, %s71
      %s74 = sphi 0, %s73
      %s88 = sphi 0, %s74
      %s92 = sphi 0, %s92
      %s94 = sphi 0, %s92
      %s95 = sphi 0, %s94
      %s109 = sphi 0, %s95
      %s113 = sphi 0, %s113
      %s115 = sphi 0, %s113
      %s116 = sphi 0, %s115
      %s130 = sphi 0, %s116
      %s134 = sphi 0, %s134
      %s136 = sphi 0, %s134
      %s137 = sphi 0, %s136
      %s151 = sphi 0, %s137
      %s155 = sphi 0, %s155
      %s157 = sphi 0, %s155
      %s158 = sphi 0, %s157
      %s172 = sphi 0, %s158
      %s178 = sphi 0, %s180
      %s181 = sphi 0, %s178
      %s182 = sphi 0, %s181
      %s198 = sphi 0, %s182
    $region4: #{tpu_custom_call.1} parent=1 // loop_header_branch
      %19 = sbr.rel (%p17) target = $region8
    $region5: #{tpu_custom_call.1} parent=1 // loop_body
      %s21 = ssub.s32 %s16, 1
      %s22 = ssub.s32 %s16, 2
      %s23 = sadd.s32 %s16, 1
      %s24 = ssub.s32 %s16, %s23
      %p25 = scmp.eq.s32.totalorder %s24, 0
      %s27 = sadd.s32 %s26, 1
      %s28 = scalar_select %p25, %s26, %s27
      %p31 = pneg %p25
      %p32 = scmp.eq.s32.totalorder %s16, 1
      %p33 = por %p31, %p32
      %p34 = scmp.ne.s32.totalorder %s26, %s29
      %p35 = scmp.eq.s32.totalorder %s16, 0
      %p36 = por %p34, %p35
      %p37 = scmp.ne.s32.totalorder %s26, %s29
      %p38 = scmp.eq.s32.totalorder %s21, 1
      %p39 = por %p37, %p38
      %p40 = scmp.ne.s32.totalorder %s29, %s30
      %p41 = scmp.eq.s32.totalorder %s21, 0
      %p42 = por %p40, %p41
      %p43 = scmp.ne.s32.totalorder %s29, %s30
      %p44 = scmp.eq.s32.totalorder %s22, 1
      %p45 = por %p43, %p44
      %p47 = scmp.ne.s32.totalorder %s30, %s46
      %p48 = scmp.eq.s32.totalorder %s22, 0
      %p49 = por %p47, %p48
      %s51 = sadd.s32 %s50, 1
      %p54 = scmp.eq.s32.totalorder %s16, 1
      %p55 = scmp.ne.s32.totalorder %s50, %s52
      %p56 = scmp.eq.s32.totalorder %s16, 0
      %p57 = por %p55, %p56
      %p58 = scmp.ne.s32.totalorder %s50, %s52
      %p59 = scmp.eq.s32.totalorder %s21, 1
      %p60 = por %p58, %p59
      %p61 = scmp.ne.s32.totalorder %s52, %s53
      %p62 = scmp.eq.s32.totalorder %s21, 0
      %p63 = por %p61, %p62
      %p64 = scmp.ne.s32.totalorder %s52, %s53
      %p65 = scmp.eq.s32.totalorder %s22, 1
      %p66 = por %p64, %p65
      %p68 = scmp.ne.s32.totalorder %s53, %s67
      %p69 = scmp.eq.s32.totalorder %s22, 0
      %p70 = por %p68, %p69
      %s72 = sadd.s32 %s71, 1
      %p75 = scmp.eq.s32.totalorder %s16, 1
      %p76 = scmp.ne.s32.totalorder %s71, %s73
      %p77 = scmp.eq.s32.totalorder %s16, 0
      %p78 = por %p76, %p77
      %p79 = scmp.ne.s32.totalorder %s71, %s73
      %p80 = scmp.eq.s32.totalorder %s21, 1
      %p81 = por %p79, %p80
      %p82 = scmp.ne.s32.totalorder %s73, %s74
      %p83 = scmp.eq.s32.totalorder %s21, 0
      %p84 = por %p82, %p83
      %p85 = scmp.ne.s32.totalorder %s73, %s74
      %p86 = scmp.eq.s32.totalorder %s22, 1
      %p87 = por %p85, %p86
      %p89 = scmp.ne.s32.totalorder %s74, %s88
      %p90 = scmp.eq.s32.totalorder %s22, 0
      %p91 = por %p89, %p90
      %s93 = sadd.s32 %s92, 1
      %p96 = scmp.eq.s32.totalorder %s16, 1
      %p97 = scmp.ne.s32.totalorder %s92, %s94
      %p98 = scmp.eq.s32.totalorder %s16, 0
      %p99 = por %p97, %p98
      %p100 = scmp.ne.s32.totalorder %s92, %s94
      %p101 = scmp.eq.s32.totalorder %s21, 1
      %p102 = por %p100, %p101
      %p103 = scmp.ne.s32.totalorder %s94, %s95
      %p104 = scmp.eq.s32.totalorder %s21, 0
      %p105 = por %p103, %p104
      %p106 = scmp.ne.s32.totalorder %s94, %s95
      %p107 = scmp.eq.s32.totalorder %s22, 1
      %p108 = por %p106, %p107
      %p110 = scmp.ne.s32.totalorder %s95, %s109
      %p111 = scmp.eq.s32.totalorder %s22, 0
      %p112 = por %p110, %p111
      %s114 = sadd.s32 %s113, 1
      %p117 = scmp.eq.s32.totalorder %s16, 1
      %p118 = scmp.ne.s32.totalorder %s113, %s115
      %p119 = scmp.eq.s32.totalorder %s16, 0
      %p120 = por %p118, %p119
      %p121 = scmp.ne.s32.totalorder %s113, %s115
      %p122 = scmp.eq.s32.totalorder %s21, 1
      %p123 = por %p121, %p122
      %p124 = scmp.ne.s32.totalorder %s115, %s116
      %p125 = scmp.eq.s32.totalorder %s21, 0
      %p126 = por %p124, %p125
      %p127 = scmp.ne.s32.totalorder %s115, %s116
      %p128 = scmp.eq.s32.totalorder %s22, 1
      %p129 = por %p127, %p128
      %p131 = scmp.ne.s32.totalorder %s116, %s130
      %p132 = scmp.eq.s32.totalorder %s22, 0
      %p133 = por %p131, %p132
      %s135 = sadd.s32 %s134, 1
      %p138 = scmp.eq.s32.totalorder %s16, 1
      %p139 = scmp.ne.s32.totalorder %s134, %s136
      %p140 = scmp.eq.s32.totalorder %s16, 0
      %p141 = por %p139, %p140
      %p142 = scmp.ne.s32.totalorder %s134, %s136
      %p143 = scmp.eq.s32.totalorder %s21, 1
      %p144 = por %p142, %p143
      %p145 = scmp.ne.s32.totalorder %s136, %s137
      %p146 = scmp.eq.s32.totalorder %s21, 0
      %p147 = por %p145, %p146
      %p148 = scmp.ne.s32.totalorder %s136, %s137
      %p149 = scmp.eq.s32.totalorder %s22, 1
      %p150 = por %p148, %p149
      %p152 = scmp.ne.s32.totalorder %s137, %s151
      %p153 = scmp.eq.s32.totalorder %s22, 0
      %p154 = por %p152, %p153
      %s156 = sadd.s32 %s155, 1
      %p159 = scmp.eq.s32.totalorder %s16, 1
      %p160 = scmp.ne.s32.totalorder %s155, %s157
      %p161 = scmp.eq.s32.totalorder %s16, 0
      %p162 = por %p160, %p161
      %p163 = scmp.ne.s32.totalorder %s155, %s157
      %p164 = scmp.eq.s32.totalorder %s21, 1
      %p165 = por %p163, %p164
      %p166 = scmp.ne.s32.totalorder %s157, %s158
      %p167 = scmp.eq.s32.totalorder %s21, 0
      %p168 = por %p166, %p167
      %p169 = scmp.ne.s32.totalorder %s157, %s158
      %p170 = scmp.eq.s32.totalorder %s22, 1
      %p171 = por %p169, %p170
      %p173 = scmp.ne.s32.totalorder %s158, %s172
      %p174 = scmp.eq.s32.totalorder %s22, 0
      %p175 = por %p173, %p174
      %s176 = ssub.s32 %s16, %s23
      %p177 = scmp.eq.s32.totalorder %s176, 0
      %s179 = sadd.s32 %s178, 1
      %s180 = scalar_select %p177, %s178, %s179
      %p183 = pneg %p177
      %p184 = scmp.eq.s32.totalorder %s16, 1
      %p185 = por %p183, %p184
      %p186 = scmp.ne.s32.totalorder %s178, %s181
      %p187 = scmp.eq.s32.totalorder %s16, 0
      %p188 = por %p186, %p187
      %p189 = scmp.ne.s32.totalorder %s178, %s181
      %p190 = scmp.eq.s32.totalorder %s21, 1
      %p191 = por %p189, %p190
      %p192 = scmp.ne.s32.totalorder %s181, %s182
      %p193 = scmp.eq.s32.totalorder %s21, 0
      %p194 = por %p192, %p193
      %p195 = scmp.ne.s32.totalorder %s181, %s182
      %p196 = scmp.eq.s32.totalorder %s22, 1
      %p197 = por %p195, %p196
      %p199 = scmp.ne.s32.totalorder %s182, %s198
      %p200 = scmp.eq.s32.totalorder %s22, 0
      %p201 = por %p199, %p200
      %p202 = scmp.le.s32.totalorder 1, %s16
      %p203 = scmp.lt.s32.totalorder %s16, 3
      %p204 = pnand %p202, %p203
      %p205 = pneg %p204
      // Predicated region
      $region9: #{tpu_custom_call.1} parent=5 // pred_check
        _
      $region10: #{tpu_custom_call.1} parent=5 // pred_check_branch
        %207 = sbr.rel (%p204) target = $region12
      $region11: #{tpu_custom_call.1} parent=5 // pred_region
        %s208 = ssub.s32 %s16, 1
        // Predicated region
        $region13: #{tpu_custom_call.1} parent=11 // pred_check
          %p209 = pneg %p63
        $region14: #{tpu_custom_call.1} parent=11 // pred_check_branch
          %211 = sbr.rel (%p209) target = $region16
        $region15: #{tpu_custom_call.1} parent=11 // pred_region
          _
        $region16: #{tpu_custom_call.1} parent=11 // pred_fallthru
          _
        // Predicated region
        $region17: #{tpu_custom_call.1} parent=11 // pred_check
          %p212 = pneg %p84
        $region18: #{tpu_custom_call.1} parent=11 // pred_check_branch
          %214 = sbr.rel (%p212) target = $region20
        $region19: #{tpu_custom_call.1} parent=11 // pred_region
          %216 = vsyncadd [#allocation3], 0
          %s217 = sshll.u32 %s2, 4
          %s218 = int_to_ptr.hbm [resolvable:$true] %s217
          %s219 = sshll.u32 [#allocation2], 4
          %s220 = int_to_ptr.vmem [resolvable:$true] %s219
          %225 = dma.hbm_to_vmem [thread:$0]  %s218, 8192, %s220, [#allocation3], 128, 128, 8
        $region20: #{tpu_custom_call.1} parent=11 // pred_fallthru
          _
        // Predicated region
        $region21: #{tpu_custom_call.1} parent=11 // pred_check
          %p226 = pneg %p105
        $region22: #{tpu_custom_call.1} parent=11 // pred_check_branch
          %228 = sbr.rel (%p226) target = $region24
        $region23: #{tpu_custom_call.1} parent=11 // pred_region
          %230 = vsyncadd [#allocation5], 0
          %s231 = sshll.u32 %s3, 4
          %s232 = int_to_ptr.hbm [resolvable:$true] %s231
          %s233 = sshll.u32 [#allocation4], 4
          %s234 = int_to_ptr.vmem [resolvable:$true] %s233
          %239 = dma.hbm_to_vmem [thread:$0]  %s232, 2048, %s234, [#allocation5], 64, 64, 4
        $region24: #{tpu_custom_call.1} parent=11 // pred_fallthru
          _
        // Predicated region
        $region25: #{tpu_custom_call.1} parent=11 // pred_check
          %p240 = pneg %p126
        $region26: #{tpu_custom_call.1} parent=11 // pred_check_branch
          %242 = sbr.rel (%p240) target = $region28
        $region27: #{tpu_custom_call.1} parent=11 // pred_region
          %244 = vsyncadd [#allocation5], 0
          %s245 = sshll.u32 %s4, 4
          %s246 = int_to_ptr.hbm [resolvable:$true] %s245
          %s247 = sshll.u32 [#allocation6], 4
          %s248 = int_to_ptr.vmem [resolvable:$true] %s247
          %253 = dma.hbm_to_vmem [thread:$0]  %s246, 1024, %s248, [#allocation5], 64, 64, 4
        $region28: #{tpu_custom_call.1} parent=11 // pred_fallthru
          _
        // Predicated region
        $region29: #{tpu_custom_call.1} parent=11 // pred_check
          %p254 = pneg %p147
        $region30: #{tpu_custom_call.1} parent=11 // pred_check_branch
          %256 = sbr.rel (%p254) target = $region32
        $region31: #{tpu_custom_call.1} parent=11 // pred_region
          %258 = vsyncadd [#allocation8], 0
          %s259 = sshll.u32 %s5, 4
          %s260 = int_to_ptr.hbm [resolvable:$true] %s259
          %s261 = sshll.u32 [#allocation7], 4
          %s262 = int_to_ptr.vmem [resolvable:$true] %s261
          %267 = dma.hbm_to_vmem [thread:$0]  %s260, 1024, %s262, [#allocation8], 64, 64, 4
        $region32: #{tpu_custom_call.1} parent=11 // pred_fallthru
          _
        // Predicated region
        $region33: #{tpu_custom_call.1} parent=11 // pred_check
          %p268 = pneg %p168
        $region34: #{tpu_custom_call.1} parent=11 // pred_check_branch
          %270 = sbr.rel (%p268) target = $region36
        $region35: #{tpu_custom_call.1} parent=11 // pred_region
          _
        $region36: #{tpu_custom_call.1} parent=11 // pred_fallthru
          _
      $region12: #{tpu_custom_call.1} parent=5 // pred_fallthru
        _
      %p271 = scmp.lt.s32.totalorder %s16, 2
      // Predicated region
      $region37: #{tpu_custom_call.1} parent=5 // pred_check
        %p272 = pneg %p271
      $region38: #{tpu_custom_call.1} parent=5 // pred_check_branch
        %274 = sbr.rel (%p272) target = $region40
      $region39: #{tpu_custom_call.1} parent=5 // pred_region
        // Predicated region
        $region41: #{tpu_custom_call.1} parent=39 // pred_check
          %p275 = pneg %p36
        $region42: #{tpu_custom_call.1} parent=39 // pred_check_branch
          %277 = sbr.rel (%p275) target = $region44
        $region43: #{tpu_custom_call.1} parent=39 // pred_region
          %s278 = smul.u32 4, %s16
          %p279 = scmp.lt.s32.totalorder %s278, 7
          %s280 = scalar_select %p279, %s278, 7
          %s281 = smul.addr %s280, 8
          %s282 = scalar_lea.vmem %s0, %s281
          %s283 = smul.u32 4, %s16
        $region44: #{tpu_custom_call.1} parent=39 // pred_fallthru
          _
      $region40: #{tpu_custom_call.1} parent=5 // pred_fallthru
        _
      %p284 = scmp.le.s32.totalorder 1, %s16
      %p285 = scmp.lt.s32.totalorder %s16, 3
      %p286 = pnand %p284, %p285
      %p287 = pneg %p286
      // Predicated region
      $region45: #{tpu_custom_call.1} parent=5 // pred_check
        _
      $region46: #{tpu_custom_call.1} parent=5 // pred_check_branch
        %289 = sbr.rel (%p286) target = $region48
      $region47: #{tpu_custom_call.1} parent=5 // pred_region
        %s290 = ssub.s32 %s16, 1
        // Predicated region
        $region49: #{tpu_custom_call.1} parent=47 // pred_check
          %p291 = pneg %p84
        $region50: #{tpu_custom_call.1} parent=47 // pred_check_branch
          %293 = sbr.rel (%p291) target = $region52
        $region51: #{tpu_custom_call.1} parent=47 // pred_region
          %295 = dma.done [#allocation3], 8192
        $region52: #{tpu_custom_call.1} parent=47 // pred_fallthru
          _
        // Predicated region
        $region53: #{tpu_custom_call.1} parent=47 // pred_check
          %p296 = pneg %p105
        $region54: #{tpu_custom_call.1} parent=47 // pred_check_branch
          %298 = sbr.rel (%p296) target = $region56
        $region55: #{tpu_custom_call.1} parent=47 // pred_region
          %300 = dma.done [#allocation5], 2048
        $region56: #{tpu_custom_call.1} parent=47 // pred_fallthru
          _
        // Predicated region
        $region57: #{tpu_custom_call.1} parent=47 // pred_check
          %p301 = pneg %p126
        $region58: #{tpu_custom_call.1} parent=47 // pred_check_branch
          %303 = sbr.rel (%p301) target = $region60
        $region59: #{tpu_custom_call.1} parent=47 // pred_region
          %305 = dma.done [#allocation5], 1024
        $region60: #{tpu_custom_call.1} parent=47 // pred_fallthru
          _
        // Predicated region
        $region61: #{tpu_custom_call.1} parent=47 // pred_check
          %p306 = pneg %p147
        $region62: #{tpu_custom_call.1} parent=47 // pred_check_branch
          %308 = sbr.rel (%p306) target = $region64
        $region63: #{tpu_custom_call.1} parent=47 // pred_region
          %310 = dma.done [#allocation8], 1024
        $region64: #{tpu_custom_call.1} parent=47 // pred_fallthru
          _
        %s311 = smul.u32 4, %s21
        %p312 = scmp.lt.s32.totalorder %s311, 7
        %s313 = scalar_select %p312, %s311, 7
        %s314 = smul.addr %s313, 8
        %s315 = scalar_lea.vmem %s0, %s314
        %p316 = pneg %p42
        %p317 = pneg %p39
        %p318 = pneg %p63
        %p319 = pneg %p60
        %p320 = pneg %p84
        %p321 = pneg %p81
        %p322 = pneg %p105
        %p323 = pneg %p102
        %p324 = pneg %p126
        %p325 = pneg %p123
        %p326 = pneg %p147
        %p327 = pneg %p144
        %p328 = pneg %p168
        %p329 = pneg %p165
        %p330 = pneg %p194
        %p331 = pneg %p191
        %s332 = smul.u32 4, %s21
        %p333 = scmp.lt.s32.totalorder %s332, 7
        %s334 = scalar_select %p333, %s332, 7
        %s335 = smul.addr %s334, 8
        %s336 = scalar_lea.vmem %s7, %s335
        %s337 = smul.u32 4, %s21
        %p338 = scmp.lt.s32.totalorder %s337, 7
        %s339 = scalar_select %p338, %s337, 7
        %s340 = smul.addr %s339, 8
        %s341 = scalar_lea.vmem %s0, %s340
        %s342 = smul.u32 4, %s21
        %s343 = smul.u32 4, %s21
        %p344 = scmp.lt.s32.totalorder %s343, 7
        %s345 = scalar_select %p344, %s343, 7
        %s346 = smul.addr %s345, 8
        %s347 = scalar_lea.vmem %s7, %s346
        %s348 = smul.u32 4, %s21
        %v350 = vld [vmem:[%s341] sm:$0xff]
        %v351 = vld [vmem:[%s341 + $0x8] sm:$0xff]
        %v352 = vld [vmem:[%s341 + $0x10] sm:$0xff]
        %v353 = vld [vmem:[%s341 + $0x18] sm:$0xff]
        %v354 = vpack.c.bf16 %v351, %v350
        %v355 = vpack.c.bf16 %v353, %v352
        %v356 = vld [vmem:[%s1] sm:$0xff]
        %v357 = vld [vmem:[%s1 + $0x8] sm:$0xff]
        %v358 = vld [vmem:[%s1 + $0x10] sm:$0xff]
        %v359 = vld [vmem:[%s1 + $0x18] sm:$0xff]
        %v360 = vld [vmem:[%s1 + $0x20] sm:$0xff]
        %v361 = vld [vmem:[%s1 + $0x28] sm:$0xff]
        %v362 = vld [vmem:[%s1 + $0x30] sm:$0xff]
        %v363 = vld [vmem:[%s1 + $0x38] sm:$0xff]
        %v364 = vld [vmem:[%s6] ss:$8 sm:$0xf]
        %v366 = vperm.slane %v364, 0
        %v367 = vperm.slane %v364, 1
        %v368 = vperm.slane %v364, 2
        %v369 = vperm.slane %v364, 3
        %v382 = vunpack.c.l.b16 %v356
        %v383 = vunpack.c.h.b16 %v356
        %v384 = vunpack.c.l.b16 %v357
        %v385 = vunpack.c.h.b16 %v357
        %v386 = vunpack.c.l.b16 %v358
        %v387 = vunpack.c.h.b16 %v358
        %v388 = vunpack.c.l.b16 %v359
        %v389 = vunpack.c.h.b16 %v359
        %v390 = vunpack.c.l.b16 %v360
        %v391 = vunpack.c.h.b16 %v360
        %v392 = vunpack.c.l.b16 %v361
        %v393 = vunpack.c.h.b16 %v361
        %v394 = vunpack.c.l.b16 %v362
        %v395 = vunpack.c.h.b16 %v362
        %v396 = vunpack.c.l.b16 %v363
        %v397 = vunpack.c.h.b16 %v363
        %v398 = vpack.c.b16 %v386, %v382
        %v399 = vpack.c.b16 %v387, %v383
        %v400 = vpack.c.b16 %v388, %v384
        %v401 = vpack.c.b16 %v389, %v385
        %v402 = vpack.c.b16 %v394, %v390
        %v403 = vpack.c.b16 %v395, %v391
        %v404 = vpack.c.b16 %v396, %v392
        %v405 = vpack.c.b16 %v397, %v393
        %vm414 = vcmask 261120
        %v416 = vsel %vm414, %v354, 0
        %v419 = vsel %vm414, %v355, 0
        %421 = vmatpush.bf16.msra.mxu0 0
        %422 = vmatpush.bf16.msra.mxu0 0
        %423 = vmatpush.bf16.msra.mxu0 0
        %424 = vmatpush.bf16.msra.mxu0 0
        %425 = vmatpush.bf16.msra.mxu0 0
        %426 = vmatpush.bf16.msra.mxu0 0
        %427 = vmatpush.bf16.msra.mxu0 %v402
        %428 = vmatpush.bf16.msra.mxu0 %v398
        %429 = vmatmul.bf16.gmra.mxu0 %v416
        %v430 = vpop.f32.mrf.mxu0
        %v431 = vadd.f32 %v366, %v430
        %v432 = vpop.f32.mrf.mxu0
        %v433 = vadd.f32 %v366, %v432
        %434 = vmatmul.bf16.gmra.mxu0 %v419
        %v435 = vpop.f32.mrf.mxu0
        %v436 = vadd.f32 %v366, %v435
        %v437 = vpop.f32.mrf.mxu0
        %v438 = vadd.f32 %v366, %v437
        %439 = vdwg.mxu0
        %440 = vmatpush.bf16.msra.mxu0 0
        %441 = vmatpush.bf16.msra.mxu0 0
        %442 = vmatpush.bf16.msra.mxu0 0
        %443 = vmatpush.bf16.msra.mxu0 0
        %444 = vmatpush.bf16.msra.mxu0 0
        %445 = vmatpush.bf16.msra.mxu0 0
        %446 = vmatpush.bf16.msra.mxu0 %v403
        %447 = vmatpush.bf16.msra.mxu0 %v399
        %448 = vmatmul.bf16.gmra.mxu0 %v416
        %v449 = vpop.f32.mrf.mxu0
        %v450 = vadd.f32 %v367, %v449
        %v451 = vpop.f32.mrf.mxu0
        %v452 = vadd.f32 %v367, %v451
        %453 = vmatmul.bf16.gmra.mxu0 %v419
        %v454 = vpop.f32.mrf.mxu0
        %v455 = vadd.f32 %v367, %v454
        %v456 = vpop.f32.mrf.mxu0
        %v457 = vadd.f32 %v367, %v456
        %458 = vdwg.mxu0
        %459 = vmatpush.bf16.msra.mxu0 0
        %460 = vmatpush.bf16.msra.mxu0 0
        %461 = vmatpush.bf16.msra.mxu0 0
        %462 = vmatpush.bf16.msra.mxu0 0
        %463 = vmatpush.bf16.msra.mxu0 0
        %464 = vmatpush.bf16.msra.mxu0 0
        %465 = vmatpush.bf16.msra.mxu0 %v404
        %466 = vmatpush.bf16.msra.mxu0 %v400
        %467 = vmatmul.bf16.gmra.mxu0 %v416
        %v468 = vpop.f32.mrf.mxu0
        %v469 = vadd.f32 %v368, %v468
        %v470 = vpop.f32.mrf.mxu0
        %v471 = vadd.f32 %v368, %v470
        %472 = vmatmul.bf16.gmra.mxu0 %v419
        %v473 = vpop.f32.mrf.mxu0
        %v474 = vadd.f32 %v368, %v473
        %v475 = vpop.f32.mrf.mxu0
        %v476 = vadd.f32 %v368, %v475
        %477 = vdwg.mxu0
        %478 = vmatpush.bf16.msra.mxu0 0
        %479 = vmatpush.bf16.msra.mxu0 0
        %480 = vmatpush.bf16.msra.mxu0 0
        %481 = vmatpush.bf16.msra.mxu0 0
        %482 = vmatpush.bf16.msra.mxu0 0
        %483 = vmatpush.bf16.msra.mxu0 0
        %484 = vmatpush.bf16.msra.mxu0 %v405
        %485 = vmatpush.bf16.msra.mxu0 %v401
        %486 = vmatmul.bf16.gmra.mxu0 %v416
        %v487 = vpop.f32.mrf.mxu0
        %v488 = vadd.f32 %v369, %v487
        %v489 = vpop.f32.mrf.mxu0
        %v490 = vadd.f32 %v369, %v489
        %491 = vmatmul.bf16.gmra.mxu0 %v419
        %v492 = vpop.f32.mrf.mxu0
        %v493 = vadd.f32 %v369, %v492
        %v494 = vpop.f32.mrf.mxu0
        %v495 = vadd.f32 %v369, %v494
        %496 = vdwg.mxu0
        %v497 = vmin.f32 %v431, 0.0
        %v498 = vmin.f32 %v450, 0.0
        %v499 = vmin.f32 %v469, 0.0
        %v500 = vmin.f32 %v488, 0.0
        %v501 = vmin.f32 %v433, 0.0
        %v502 = vmin.f32 %v452, 0.0
        %v503 = vmin.f32 %v471, 0.0
        %v504 = vmin.f32 %v490, 0.0
        %v505 = vmin.f32 %v436, 0.0
        %v506 = vmin.f32 %v455, 0.0
        %v507 = vmin.f32 %v474, 0.0
        %v508 = vmin.f32 %v493, 0.0
        %v509 = vmin.f32 %v438, 0.0
        %v510 = vmin.f32 %v457, 0.0
        %v511 = vmin.f32 %v476, 0.0
        %v512 = vmin.f32 %v495, 0.0
        %v513 = vmul.f32 %v497, 1.442695
        %v514 = vpow.pop %v513
        %v515 = vmul.f32 %v498, 1.442695
        %v516 = vpow.pop %v515
        %v517 = vmul.f32 %v499, 1.442695
        %v518 = vpow.pop %v517
        %v519 = vmul.f32 %v500, 1.442695
        %v520 = vpow.pop %v519
        %v521 = vmul.f32 %v501, 1.442695
        %v522 = vpow.pop %v521
        %v523 = vmul.f32 %v502, 1.442695
        %v524 = vpow.pop %v523
        %v525 = vmul.f32 %v503, 1.442695
        %v526 = vpow.pop %v525
        %v527 = vmul.f32 %v504, 1.442695
        %v528 = vpow.pop %v527
        %v529 = vmul.f32 %v505, 1.442695
        %v530 = vpow.pop %v529
        %v531 = vmul.f32 %v506, 1.442695
        %v532 = vpow.pop %v531
        %v533 = vmul.f32 %v507, 1.442695
        %v534 = vpow.pop %v533
        %v535 = vmul.f32 %v508, 1.442695
        %v536 = vpow.pop %v535
        %v537 = vmul.f32 %v509, 1.442695
        %v538 = vpow.pop %v537
        %v539 = vmul.f32 %v510, 1.442695
        %v540 = vpow.pop %v539
        %v541 = vmul.f32 %v511, 1.442695
        %v542 = vpow.pop %v541
        %v543 = vmul.f32 %v512, 1.442695
        %v544 = vpow.pop %v543
        %v545 = vsub.f32 %v514, 1.0
        %v546 = vsub.f32 %v516, 1.0
        %v547 = vsub.f32 %v518, 1.0
        %v548 = vsub.f32 %v520, 1.0
        %v549 = vsub.f32 %v522, 1.0
        %v550 = vsub.f32 %v524, 1.0
        %v551 = vsub.f32 %v526, 1.0
        %v552 = vsub.f32 %v528, 1.0
        %v553 = vsub.f32 %v530, 1.0
        %v554 = vsub.f32 %v532, 1.0
        %v555 = vsub.f32 %v534, 1.0
        %v556 = vsub.f32 %v536, 1.0
        %v557 = vsub.f32 %v538, 1.0
        %v558 = vsub.f32 %v540, 1.0
        %v559 = vsub.f32 %v542, 1.0
        %v560 = vsub.f32 %v544, 1.0
        %v561 = vmul.f32 %v545, 1.6732632
        %v562 = vmul.f32 %v546, 1.6732632
        %v563 = vmul.f32 %v547, 1.6732632
        %v564 = vmul.f32 %v548, 1.6732632
        %v565 = vmul.f32 %v549, 1.6732632
        %v566 = vmul.f32 %v550, 1.6732632
        %v567 = vmul.f32 %v551, 1.6732632
        %v568 = vmul.f32 %v552, 1.6732632
        %v569 = vmul.f32 %v553, 1.6732632
        %v570 = vmul.f32 %v554, 1.6732632
        %v571 = vmul.f32 %v555, 1.6732632
        %v572 = vmul.f32 %v556, 1.6732632
        %v573 = vmul.f32 %v557, 1.6732632
        %v574 = vmul.f32 %v558, 1.6732632
        %v575 = vmul.f32 %v559, 1.6732632
        %v576 = vmul.f32 %v560, 1.6732632
        %vm577 = vcmp.gt.f32.partialorder %v431, 0.0
        %vm578 = vcmp.gt.f32.partialorder %v450, 0.0
        %vm579 = vcmp.gt.f32.partialorder %v469, 0.0
        %vm580 = vcmp.gt.f32.partialorder %v488, 0.0
        %vm581 = vcmp.gt.f32.partialorder %v433, 0.0
        %vm582 = vcmp.gt.f32.partialorder %v452, 0.0
        %vm583 = vcmp.gt.f32.partialorder %v471, 0.0
        %vm584 = vcmp.gt.f32.partialorder %v490, 0.0
        %vm585 = vcmp.gt.f32.partialorder %v436, 0.0
        %vm586 = vcmp.gt.f32.partialorder %v455, 0.0
        %vm587 = vcmp.gt.f32.partialorder %v474, 0.0
        %vm588 = vcmp.gt.f32.partialorder %v493, 0.0
        %vm589 = vcmp.gt.f32.partialorder %v438, 0.0
        %vm590 = vcmp.gt.f32.partialorder %v457, 0.0
        %vm591 = vcmp.gt.f32.partialorder %v476, 0.0
        %vm592 = vcmp.gt.f32.partialorder %v495, 0.0
        %v593 = vsel %vm577, %v431, %v561
        %v594 = vsel %vm578, %v450, %v562
        %v595 = vsel %vm579, %v469, %v563
        %v596 = vsel %vm580, %v488, %v564
        %v597 = vsel %vm581, %v433, %v565
        %v598 = vsel %vm582, %v452, %v566
        %v599 = vsel %vm583, %v471, %v567
        %v600 = vsel %vm584, %v490, %v568
        %v601 = vsel %vm585, %v436, %v569
        %v602 = vsel %vm586, %v455, %v570
        %v603 = vsel %vm587, %v474, %v571
        %v604 = vsel %vm588, %v493, %v572
        %v605 = vsel %vm589, %v438, %v573
        %v606 = vsel %vm590, %v457, %v574
        %v607 = vsel %vm591, %v476, %v575
        %v608 = vsel %vm592, %v495, %v576
        %v609 = vpack.c.bf16 %v597, %v593
        %v610 = vpack.c.bf16 %v598, %v594
        %v611 = vpack.c.bf16 %v599, %v595
        %v612 = vpack.c.bf16 %v600, %v596
        %v613 = vpack.c.bf16 %v605, %v601
        %v614 = vpack.c.bf16 %v606, %v602
        %v615 = vpack.c.bf16 %v607, %v603
        %v616 = vpack.c.bf16 %v608, %v604
        %v617 = vld [vmem:[#allocation2] sm:$0xff]
        %v618 = vld [vmem:[#allocation2 + $0x8] sm:$0xff]
        %v619 = vld [vmem:[#allocation2 + $0x10] sm:$0xff]
        %v620 = vld [vmem:[#allocation2 + $0x18] sm:$0xff]
        %v621 = vld [vmem:[#allocation2 + $0x20] sm:$0xff]
        %v622 = vld [vmem:[#allocation2 + $0x28] sm:$0xff]
        %v623 = vld [vmem:[#allocation2 + $0x30] sm:$0xff]
        %v624 = vld [vmem:[#allocation2 + $0x38] sm:$0xff]
        %v625 = vld [vmem:[#allocation2 + $0x40] sm:$0xff]
        %v626 = vld [vmem:[#allocation2 + $0x48] sm:$0xff]
        %v627 = vld [vmem:[#allocation2 + $0x50] sm:$0xff]
        %v628 = vld [vmem:[#allocation2 + $0x58] sm:$0xff]
        %v629 = vld [vmem:[#allocation2 + $0x60] sm:$0xff]
        %v630 = vld [vmem:[#allocation2 + $0x68] sm:$0xff]
        %v631 = vld [vmem:[#allocation2 + $0x70] sm:$0xff]
        %v632 = vld [vmem:[#allocation2 + $0x78] sm:$0xff]
        %v633 = vld [vmem:[#allocation2 + $0x80] sm:$0xff]
        %v634 = vld [vmem:[#allocation2 + $0x88] sm:$0xff]
        %v635 = vld [vmem:[#allocation2 + $0x90] sm:$0xff]
        %v636 = vld [vmem:[#allocation2 + $0x98] sm:$0xff]
        %v637 = vld [vmem:[#allocation2 + $0xa0] sm:$0xff]
        %v638 = vld [vmem:[#allocation2 + $0xa8] sm:$0xff]
        %v639 = vld [vmem:[#allocation2 + $0xb0] sm:$0xff]
        %v640 = vld [vmem:[#allocation2 + $0xb8] sm:$0xff]
        %v641 = vld [vmem:[#allocation2 + $0xc0] sm:$0xff]
        %v642 = vld [vmem:[#allocation2 + $0xc8] sm:$0xff]
        %v643 = vld [vmem:[#allocation2 + $0xd0] sm:$0xff]
        %v644 = vld [vmem:[#allocation2 + $0xd8] sm:$0xff]
        %v645 = vld [vmem:[#allocation2 + $0xe0] sm:$0xff]
        %v646 = vld [vmem:[#allocation2 + $0xe8] sm:$0xff]
        %v647 = vld [vmem:[#allocation2 + $0xf0] sm:$0xff]
        %v648 = vld [vmem:[#allocation2 + $0xf8] sm:$0xff]
        %v649 = vld [vmem:[#allocation2 + $0x100] sm:$0xff]
        %v650 = vld [vmem:[#allocation2 + $0x108] sm:$0xff]
        %v651 = vld [vmem:[#allocation2 + $0x110] sm:$0xff]
        %v652 = vld [vmem:[#allocation2 + $0x118] sm:$0xff]
        %v653 = vld [vmem:[#allocation2 + $0x120] sm:$0xff]
        %v654 = vld [vmem:[#allocation2 + $0x128] sm:$0xff]
        %v655 = vld [vmem:[#allocation2 + $0x130] sm:$0xff]
        %v656 = vld [vmem:[#allocation2 + $0x138] sm:$0xff]
        %v657 = vld [vmem:[#allocation2 + $0x140] sm:$0xff]
        %v658 = vld [vmem:[#allocation2 + $0x148] sm:$0xff]
        %v659 = vld [vmem:[#allocation2 + $0x150] sm:$0xff]
        %v660 = vld [vmem:[#allocation2 + $0x158] sm:$0xff]
        %v661 = vld [vmem:[#allocation2 + $0x160] sm:$0xff]
        %v662 = vld [vmem:[#allocation2 + $0x168] sm:$0xff]
        %v663 = vld [vmem:[#allocation2 + $0x170] sm:$0xff]
        %v664 = vld [vmem:[#allocation2 + $0x178] sm:$0xff]
        %v665 = vld [vmem:[#allocation2 + $0x180] sm:$0xff]
        %v666 = vld [vmem:[#allocation2 + $0x188] sm:$0xff]
        %v667 = vld [vmem:[#allocation2 + $0x190] sm:$0xff]
        %v668 = vld [vmem:[#allocation2 + $0x198] sm:$0xff]
        %v669 = vld [vmem:[#allocation2 + $0x1a0] sm:$0xff]
        %v670 = vld [vmem:[#allocation2 + $0x1a8] sm:$0xff]
        %v671 = vld [vmem:[#allocation2 + $0x1b0] sm:$0xff]
        %v672 = vld [vmem:[#allocation2 + $0x1b8] sm:$0xff]
        %v673 = vld [vmem:[#allocation2 + $0x1c0] sm:$0xff]
        %v674 = vld [vmem:[#allocation2 + $0x1c8] sm:$0xff]
        %v675 = vld [vmem:[#allocation2 + $0x1d0] sm:$0xff]
        %v676 = vld [vmem:[#allocation2 + $0x1d8] sm:$0xff]
        %v677 = vld [vmem:[#allocation2 + $0x1e0] sm:$0xff]
        %v678 = vld [vmem:[#allocation2 + $0x1e8] sm:$0xff]
        %v679 = vld [vmem:[#allocation2 + $0x1f0] sm:$0xff]
        %v680 = vld [vmem:[#allocation2 + $0x1f8] sm:$0xff]
        %s681 = scalar_lea.vmem %s6, 1
        %v682 = vld [vmem:[%s681] ss:$8 sm:$0x3]
        %v684 = vperm.slane %v682, 0
        %v685 = vperm.slane %v682, 1
        %v752 = vunpack.c.l.b16 %v617
        %v753 = vunpack.c.h.b16 %v617
        %v754 = vunpack.c.l.b16 %v618
        %v755 = vunpack.c.h.b16 %v618
        %v756 = vunpack.c.l.b16 %v619
        %v757 = vunpack.c.h.b16 %v619
        %v758 = vunpack.c.l.b16 %v620
        %v759 = vunpack.c.h.b16 %v620
        %v760 = vunpack.c.l.b16 %v621
        %v761 = vunpack.c.h.b16 %v621
        %v762 = vunpack.c.l.b16 %v622
        %v763 = vunpack.c.h.b16 %v622
        %v764 = vunpack.c.l.b16 %v623
        %v765 = vunpack.c.h.b16 %v623
        %v766 = vunpack.c.l.b16 %v624
        %v767 = vunpack.c.h.b16 %v624
        %v768 = vunpack.c.l.b16 %v625
        %v769 = vunpack.c.h.b16 %v625
        %v770 = vunpack.c.l.b16 %v626
        %v771 = vunpack.c.h.b16 %v626
        %v772 = vunpack.c.l.b16 %v627
        %v773 = vunpack.c.h.b16 %v627
        %v774 = vunpack.c.l.b16 %v628
        %v775 = vunpack.c.h.b16 %v628
        %v776 = vunpack.c.l.b16 %v629
        %v777 = vunpack.c.h.b16 %v629
        %v778 = vunpack.c.l.b16 %v630
        %v779 = vunpack.c.h.b16 %v630
        %v780 = vunpack.c.l.b16 %v631
        %v781 = vunpack.c.h.b16 %v631
        %v782 = vunpack.c.l.b16 %v632
        %v783 = vunpack.c.h.b16 %v632
        %v784 = vunpack.c.l.b16 %v633
        %v785 = vunpack.c.h.b16 %v633
        %v786 = vunpack.c.l.b16 %v634
        %v787 = vunpack.c.h.b16 %v634
        %v788 = vunpack.c.l.b16 %v635
        %v789 = vunpack.c.h.b16 %v635
        %v790 = vunpack.c.l.b16 %v636
        %v791 = vunpack.c.h.b16 %v636
        %v792 = vunpack.c.l.b16 %v637
        %v793 = vunpack.c.h.b16 %v637
        %v794 = vunpack.c.l.b16 %v638
        %v795 = vunpack.c.h.b16 %v638
        %v796 = vunpack.c.l.b16 %v639
        %v797 = vunpack.c.h.b16 %v639
        %v798 = vunpack.c.l.b16 %v640
        %v799 = vunpack.c.h.b16 %v640
        %v800 = vunpack.c.l.b16 %v641
        %v801 = vunpack.c.h.b16 %v641
        %v802 = vunpack.c.l.b16 %v642
        %v803 = vunpack.c.h.b16 %v642
        %v804 = vunpack.c.l.b16 %v643
        %v805 = vunpack.c.h.b16 %v643
        %v806 = vunpack.c.l.b16 %v644
        %v807 = vunpack.c.h.b16 %v644
        %v808 = vunpack.c.l.b16 %v645
        %v809 = vunpack.c.h.b16 %v645
        %v810 = vunpack.c.l.b16 %v646
        %v811 = vunpack.c.h.b16 %v646
        %v812 = vunpack.c.l.b16 %v647
        %v813 = vunpack.c.h.b16 %v647
        %v814 = vunpack.c.l.b16 %v648
        %v815 = vunpack.c.h.b16 %v648
        %v816 = vunpack.c.l.b16 %v649
        %v817 = vunpack.c.h.b16 %v649
        %v818 = vunpack.c.l.b16 %v650
        %v819 = vunpack.c.h.b16 %v650
        %v820 = vunpack.c.l.b16 %v651
        %v821 = vunpack.c.h.b16 %v651
        %v822 = vunpack.c.l.b16 %v652
        %v823 = vunpack.c.h.b16 %v652
        %v824 = vunpack.c.l.b16 %v653
        %v825 = vunpack.c.h.b16 %v653
        %v826 = vunpack.c.l.b16 %v654
        %v827 = vunpack.c.h.b16 %v654
        %v828 = vunpack.c.l.b16 %v655
        %v829 = vunpack.c.h.b16 %v655
        %v830 = vunpack.c.l.b16 %v656
        %v831 = vunpack.c.h.b16 %v656
        %v832 = vunpack.c.l.b16 %v657
        %v833 = vunpack.c.h.b16 %v657
        %v834 = vunpack.c.l.b16 %v658
        %v835 = vunpack.c.h.b16 %v658
        %v836 = vunpack.c.l.b16 %v659
        %v837 = vunpack.c.h.b16 %v659
        %v838 = vunpack.c.l.b16 %v660
        %v839 = vunpack.c.h.b16 %v660
        %v840 = vunpack.c.l.b16 %v661
        %v841 = vunpack.c.h.b16 %v661
        %v842 = vunpack.c.l.b16 %v662
        %v843 = vunpack.c.h.b16 %v662
        %v844 = vunpack.c.l.b16 %v663
        %v845 = vunpack.c.h.b16 %v663
        %v846 = vunpack.c.l.b16 %v664
        %v847 = vunpack.c.h.b16 %v664
        %v848 = vunpack.c.l.b16 %v665
        %v849 = vunpack.c.h.b16 %v665
        %v850 = vunpack.c.l.b16 %v666
        %v851 = vunpack.c.h.b16 %v666
        %v852 = vunpack.c.l.b16 %v667
        %v853 = vunpack.c.h.b16 %v667
        %v854 = vunpack.c.l.b16 %v668
        %v855 = vunpack.c.h.b16 %v668
        %v856 = vunpack.c.l.b16 %v669
        %v857 = vunpack.c.h.b16 %v669
        %v858 = vunpack.c.l.b16 %v670
        %v859 = vunpack.c.h.b16 %v670
        %v860 = vunpack.c.l.b16 %v671
        %v861 = vunpack.c.h.b16 %v671
        %v862 = vunpack.c.l.b16 %v672
        %v863 = vunpack.c.h.b16 %v672
        %v864 = vunpack.c.l.b16 %v673
        %v865 = vunpack.c.h.b16 %v673
        %v866 = vunpack.c.l.b16 %v674
        %v867 = vunpack.c.h.b16 %v674
        %v868 = vunpack.c.l.b16 %v675
        %v869 = vunpack.c.h.b16 %v675
        %v870 = vunpack.c.l.b16 %v676
        %v871 = vunpack.c.h.b16 %v676
        %v872 = vunpack.c.l.b16 %v677
        %v873 = vunpack.c.h.b16 %v677
        %v874 = vunpack.c.l.b16 %v678
        %v875 = vunpack.c.h.b16 %v678
        %v876 = vunpack.c.l.b16 %v679
        %v877 = vunpack.c.h.b16 %v679
        %v878 = vunpack.c.l.b16 %v680
        %v879 = vunpack.c.h.b16 %v680
        %v880 = vpack.c.b16 %v754, %v752
        %v881 = vpack.c.b16 %v755, %v753
        %v882 = vpack.c.b16 %v758, %v756
        %v883 = vpack.c.b16 %v759, %v757
        %v884 = vpack.c.b16 %v762, %v760
        %v885 = vpack.c.b16 %v763, %v761
        %v886 = vpack.c.b16 %v766, %v764
        %v887 = vpack.c.b16 %v767, %v765
        %v888 = vpack.c.b16 %v770, %v768
        %v889 = vpack.c.b16 %v771, %v769
        %v890 = vpack.c.b16 %v774, %v772
        %v891 = vpack.c.b16 %v775, %v773
        %v892 = vpack.c.b16 %v778, %v776
        %v893 = vpack.c.b16 %v779, %v777
        %v894 = vpack.c.b16 %v782, %v780
        %v895 = vpack.c.b16 %v783, %v781
        %v896 = vpack.c.b16 %v786, %v784
        %v897 = vpack.c.b16 %v787, %v785
        %v898 = vpack.c.b16 %v790, %v788
        %v899 = vpack.c.b16 %v791, %v789
        %v900 = vpack.c.b16 %v794, %v792
        %v901 = vpack.c.b16 %v795, %v793
        %v902 = vpack.c.b16 %v798, %v796
        %v903 = vpack.c.b16 %v799, %v797
        %v904 = vpack.c.b16 %v802, %v800
        %v905 = vpack.c.b16 %v803, %v801
        %v906 = vpack.c.b16 %v806, %v804
        %v907 = vpack.c.b16 %v807, %v805
        %v908 = vpack.c.b16 %v810, %v808
        %v909 = vpack.c.b16 %v811, %v809
        %v910 = vpack.c.b16 %v814, %v812
        %v911 = vpack.c.b16 %v815, %v813
        %v912 = vpack.c.b16 %v818, %v816
        %v913 = vpack.c.b16 %v819, %v817
        %v914 = vpack.c.b16 %v822, %v820
        %v915 = vpack.c.b16 %v823, %v821
        %v916 = vpack.c.b16 %v826, %v824
        %v917 = vpack.c.b16 %v827, %v825
        %v918 = vpack.c.b16 %v830, %v828
        %v919 = vpack.c.b16 %v831, %v829
        %v920 = vpack.c.b16 %v834, %v832
        %v921 = vpack.c.b16 %v835, %v833
        %v922 = vpack.c.b16 %v838, %v836
        %v923 = vpack.c.b16 %v839, %v837
        %v924 = vpack.c.b16 %v842, %v840
        %v925 = vpack.c.b16 %v843, %v841
        %v926 = vpack.c.b16 %v846, %v844
        %v927 = vpack.c.b16 %v847, %v845
        %v928 = vpack.c.b16 %v850, %v848
        %v929 = vpack.c.b16 %v851, %v849
        %v930 = vpack.c.b16 %v854, %v852
        %v931 = vpack.c.b16 %v855, %v853
        %v932 = vpack.c.b16 %v858, %v856
        %v933 = vpack.c.b16 %v859, %v857
        %v934 = vpack.c.b16 %v862, %v860
        %v935 = vpack.c.b16 %v863, %v861
        %v936 = vpack.c.b16 %v866, %v864
        %v937 = vpack.c.b16 %v867, %v865
        %v938 = vpack.c.b16 %v870, %v868
        %v939 = vpack.c.b16 %v871, %v869
        %v940 = vpack.c.b16 %v874, %v872
        %v941 = vpack.c.b16 %v875, %v873
        %v942 = vpack.c.b16 %v878, %v876
        %v943 = vpack.c.b16 %v879, %v877
        %1008 = vmatpush.bf16.msra.mxu0 %v894
        %1009 = vmatpush.bf16.msra.mxu0 %v892
        %1010 = vmatpush.bf16.msra.mxu0 %v890
        %1011 = vmatpush.bf16.msra.mxu0 %v888
        %1012 = vmatpush.bf16.msra.mxu0 %v886
        %1013 = vmatpush.bf16.msra.mxu0 %v884
        %1014 = vmatpush.bf16.msra.mxu0 %v882
        %1015 = vmatpush.bf16.msra.mxu0 %v880
        %1016 = vmatmul.bf16.gmra.mxu0 %v609
        %v1017 = vpop.f32.mrf.mxu0
        %v1018 = vadd.f32 %v684, %v1017
        %v1019 = vpop.f32.mrf.mxu0
        %v1020 = vadd.f32 %v684, %v1019
        %1021 = vmatmul.bf16.gmra.mxu0 %v613
        %v1022 = vpop.f32.mrf.mxu0
        %v1023 = vadd.f32 %v684, %v1022
        %v1024 = vpop.f32.mrf.mxu0
        %v1025 = vadd.f32 %v684, %v1024
        %1026 = vdwg.mxu0
        %1027 = vmatpush.bf16.msra.mxu0 %v910
        %1028 = vmatpush.bf16.msra.mxu0 %v908
        %1029 = vmatpush.bf16.msra.mxu0 %v906
        %1030 = vmatpush.bf16.msra.mxu0 %v904
        %1031 = vmatpush.bf16.msra.mxu0 %v902
        %1032 = vmatpush.bf16.msra.mxu0 %v900
        %1033 = vmatpush.bf16.msra.mxu0 %v898
        %1034 = vmatpush.bf16.msra.mxu0 %v896
        %1035 = vmatmul.bf16.gmra.mxu0 %v610
        %v1036 = vpop.f32.mrf.mxu0
        %v1037 = vadd.f32 %v1018, %v1036
        %v1038 = vpop.f32.mrf.mxu0
        %v1039 = vadd.f32 %v1020, %v1038
        %1040 = vmatmul.bf16.gmra.mxu0 %v614
        %v1041 = vpop.f32.mrf.mxu0
        %v1042 = vadd.f32 %v1023, %v1041
        %v1043 = vpop.f32.mrf.mxu0
        %v1044 = vadd.f32 %v1025, %v1043
        %1045 = vdwg.mxu0
        %1046 = vmatpush.bf16.msra.mxu0 %v926
        %1047 = vmatpush.bf16.msra.mxu0 %v924
        %1048 = vmatpush.bf16.msra.mxu0 %v922
        %1049 = vmatpush.bf16.msra.mxu0 %v920
        %1050 = vmatpush.bf16.msra.mxu0 %v918
        %1051 = vmatpush.bf16.msra.mxu0 %v916
        %1052 = vmatpush.bf16.msra.mxu0 %v914
        %1053 = vmatpush.bf16.msra.mxu0 %v912
        %1054 = vmatmul.bf16.gmra.mxu0 %v611
        %v1055 = vpop.f32.mrf.mxu0
        %v1056 = vadd.f32 %v1037, %v1055
        %v1057 = vpop.f32.mrf.mxu0
        %v1058 = vadd.f32 %v1039, %v1057
        %1059 = vmatmul.bf16.gmra.mxu0 %v615
        %v1060 = vpop.f32.mrf.mxu0
        %v1061 = vadd.f32 %v1042, %v1060
        %v1062 = vpop.f32.mrf.mxu0
        %v1063 = vadd.f32 %v1044, %v1062
        %1064 = vdwg.mxu0
        %1065 = vmatpush.bf16.msra.mxu0 %v942
        %1066 = vmatpush.bf16.msra.mxu0 %v940
        %1067 = vmatpush.bf16.msra.mxu0 %v938
        %1068 = vmatpush.bf16.msra.mxu0 %v936
        %1069 = vmatpush.bf16.msra.mxu0 %v934
        %1070 = vmatpush.bf16.msra.mxu0 %v932
        %1071 = vmatpush.bf16.msra.mxu0 %v930
        %1072 = vmatpush.bf16.msra.mxu0 %v928
        %1073 = vmatmul.bf16.gmra.mxu0 %v612
        %v1074 = vpop.f32.mrf.mxu0
        %v1075 = vadd.f32 %v1056, %v1074
        %v1076 = vpop.f32.mrf.mxu0
        %v1077 = vadd.f32 %v1058, %v1076
        %1078 = vmatmul.bf16.gmra.mxu0 %v616
        %v1079 = vpop.f32.mrf.mxu0
        %v1080 = vadd.f32 %v1061, %v1079
        %v1081 = vpop.f32.mrf.mxu0
        %v1082 = vadd.f32 %v1063, %v1081
        %1083 = vdwg.mxu0
        %1084 = vmatpush.bf16.msra.mxu0 %v895
        %1085 = vmatpush.bf16.msra.mxu0 %v893
        %1086 = vmatpush.bf16.msra.mxu0 %v891
        %1087 = vmatpush.bf16.msra.mxu0 %v889
        %1088 = vmatpush.bf16.msra.mxu0 %v887
        %1089 = vmatpush.bf16.msra.mxu0 %v885
        %1090 = vmatpush.bf16.msra.mxu0 %v883
        %1091 = vmatpush.bf16.msra.mxu0 %v881
        %1092 = vmatmul.bf16.gmra.mxu0 %v609
        %v1093 = vpop.f32.mrf.mxu0
        %v1094 = vadd.f32 %v685, %v1093
        %v1095 = vpop.f32.mrf.mxu0
        %v1096 = vadd.f32 %v685, %v1095
        %1097 = vmatmul.bf16.gmra.mxu0 %v613
        %v1098 = vpop.f32.mrf.mxu0
        %v1099 = vadd.f32 %v685, %v1098
        %v1100 = vpop.f32.mrf.mxu0
        %v1101 = vadd.f32 %v685, %v1100
        %1102 = vdwg.mxu0
        %1103 = vmatpush.bf16.msra.mxu0 %v911
        %1104 = vmatpush.bf16.msra.mxu0 %v909
        %1105 = vmatpush.bf16.msra.mxu0 %v907
        %1106 = vmatpush.bf16.msra.mxu0 %v905
        %1107 = vmatpush.bf16.msra.mxu0 %v903
        %1108 = vmatpush.bf16.msra.mxu0 %v901
        %1109 = vmatpush.bf16.msra.mxu0 %v899
        %1110 = vmatpush.bf16.msra.mxu0 %v897
        %1111 = vmatmul.bf16.gmra.mxu0 %v610
        %v1112 = vpop.f32.mrf.mxu0
        %v1113 = vadd.f32 %v1094, %v1112
        %v1114 = vpop.f32.mrf.mxu0
        %v1115 = vadd.f32 %v1096, %v1114
        %1116 = vmatmul.bf16.gmra.mxu0 %v614
        %v1117 = vpop.f32.mrf.mxu0
        %v1118 = vadd.f32 %v1099, %v1117
        %v1119 = vpop.f32.mrf.mxu0
        %v1120 = vadd.f32 %v1101, %v1119
        %1121 = vdwg.mxu0
        %1122 = vmatpush.bf16.msra.mxu0 %v927
        %1123 = vmatpush.bf16.msra.mxu0 %v925
        %1124 = vmatpush.bf16.msra.mxu0 %v923
        %1125 = vmatpush.bf16.msra.mxu0 %v921
        %1126 = vmatpush.bf16.msra.mxu0 %v919
        %1127 = vmatpush.bf16.msra.mxu0 %v917
        %1128 = vmatpush.bf16.msra.mxu0 %v915
        %1129 = vmatpush.bf16.msra.mxu0 %v913
        %1130 = vmatmul.bf16.gmra.mxu0 %v611
        %v1131 = vpop.f32.mrf.mxu0
        %v1132 = vadd.f32 %v1113, %v1131
        %v1133 = vpop.f32.mrf.mxu0
        %v1134 = vadd.f32 %v1115, %v1133
        %1135 = vmatmul.bf16.gmra.mxu0 %v615
        %v1136 = vpop.f32.mrf.mxu0
        %v1137 = vadd.f32 %v1118, %v1136
        %v1138 = vpop.f32.mrf.mxu0
        %v1139 = vadd.f32 %v1120, %v1138
        %1140 = vdwg.mxu0
        %1141 = vmatpush.bf16.msra.mxu0 %v943
        %1142 = vmatpush.bf16.msra.mxu0 %v941
        %1143 = vmatpush.bf16.msra.mxu0 %v939
        %1144 = vmatpush.bf16.msra.mxu0 %v937
        %1145 = vmatpush.bf16.msra.mxu0 %v935
        %1146 = vmatpush.bf16.msra.mxu0 %v933
        %1147 = vmatpush.bf16.msra.mxu0 %v931
        %1148 = vmatpush.bf16.msra.mxu0 %v929
        %1149 = vmatmul.bf16.gmra.mxu0 %v612
        %v1150 = vpop.f32.mrf.mxu0
        %v1151 = vadd.f32 %v1132, %v1150
        %v1152 = vpop.f32.mrf.mxu0
        %v1153 = vadd.f32 %v1134, %v1152
        %1154 = vmatmul.bf16.gmra.mxu0 %v616
        %v1155 = vpop.f32.mrf.mxu0
        %v1156 = vadd.f32 %v1137, %v1155
        %v1157 = vpop.f32.mrf.mxu0
        %v1158 = vadd.f32 %v1139, %v1157
        %1159 = vdwg.mxu0
        %v1160 = vmin.f32 %v1075, 0.0
        %v1161 = vmin.f32 %v1151, 0.0
        %v1162 = vmin.f32 %v1077, 0.0
        %v1163 = vmin.f32 %v1153, 0.0
        %v1164 = vmin.f32 %v1080, 0.0
        %v1165 = vmin.f32 %v1156, 0.0
        %v1166 = vmin.f32 %v1082, 0.0
        %v1167 = vmin.f32 %v1158, 0.0
        %v1168 = vmul.f32 %v1160, 1.442695
        %v1169 = vpow.pop %v1168
        %v1170 = vmul.f32 %v1161, 1.442695
        %v1171 = vpow.pop %v1170
        %v1172 = vmul.f32 %v1162, 1.442695
        %v1173 = vpow.pop %v1172
        %v1174 = vmul.f32 %v1163, 1.442695
        %v1175 = vpow.pop %v1174
        %v1176 = vmul.f32 %v1164, 1.442695
        %v1177 = vpow.pop %v1176
        %v1178 = vmul.f32 %v1165, 1.442695
        %v1179 = vpow.pop %v1178
        %v1180 = vmul.f32 %v1166, 1.442695
        %v1181 = vpow.pop %v1180
        %v1182 = vmul.f32 %v1167, 1.442695
        %v1183 = vpow.pop %v1182
        %v1184 = vsub.f32 %v1169, 1.0
        %v1185 = vsub.f32 %v1171, 1.0
        %v1186 = vsub.f32 %v1173, 1.0
        %v1187 = vsub.f32 %v1175, 1.0
        %v1188 = vsub.f32 %v1177, 1.0
        %v1189 = vsub.f32 %v1179, 1.0
        %v1190 = vsub.f32 %v1181, 1.0
        %v1191 = vsub.f32 %v1183, 1.0
        %v1192 = vmul.f32 %v1184, 1.6732632
        %v1193 = vmul.f32 %v1185, 1.6732632
        %v1194 = vmul.f32 %v1186, 1.6732632
        %v1195 = vmul.f32 %v1187, 1.6732632
        %v1196 = vmul.f32 %v1188, 1.6732632
        %v1197 = vmul.f32 %v1189, 1.6732632
        %v1198 = vmul.f32 %v1190, 1.6732632
        %v1199 = vmul.f32 %v1191, 1.6732632
        %vm1200 = vcmp.gt.f32.partialorder %v1075, 0.0
        %vm1201 = vcmp.gt.f32.partialorder %v1151, 0.0
        %vm1202 = vcmp.gt.f32.partialorder %v1077, 0.0
        %vm1203 = vcmp.gt.f32.partialorder %v1153, 0.0
        %vm1204 = vcmp.gt.f32.partialorder %v1080, 0.0
        %vm1205 = vcmp.gt.f32.partialorder %v1156, 0.0
        %vm1206 = vcmp.gt.f32.partialorder %v1082, 0.0
        %vm1207 = vcmp.gt.f32.partialorder %v1158, 0.0
        %v1208 = vsel %vm1200, %v1075, %v1192
        %v1209 = vsel %vm1201, %v1151, %v1193
        %v1210 = vsel %vm1202, %v1077, %v1194
        %v1211 = vsel %vm1203, %v1153, %v1195
        %v1212 = vsel %vm1204, %v1080, %v1196
        %v1213 = vsel %vm1205, %v1156, %v1197
        %v1214 = vsel %vm1206, %v1082, %v1198
        %v1215 = vsel %vm1207, %v1158, %v1199
        %v1216 = vpack.c.bf16 %v1210, %v1208
        %v1217 = vpack.c.bf16 %v1211, %v1209
        %v1218 = vpack.c.bf16 %v1214, %v1212
        %v1219 = vpack.c.bf16 %v1215, %v1213
        %v1220 = vld [vmem:[#allocation4] sm:$0xf]
        %v1221 = vld [vmem:[#allocation4 + $0x4] sm:$0xf]
        %v1222 = vld [vmem:[#allocation4 + $0x8] sm:$0xf]
        %v1223 = vld [vmem:[#allocation4 + $0xc] sm:$0xf]
        %v1224 = vld [vmem:[#allocation4 + $0x10] sm:$0xf]
        %v1225 = vld [vmem:[#allocation4 + $0x14] sm:$0xf]
        %v1226 = vld [vmem:[#allocation4 + $0x18] sm:$0xf]
        %v1227 = vld [vmem:[#allocation4 + $0x1c] sm:$0xf]
        %v1228 = vld [vmem:[#allocation4 + $0x20] sm:$0xf]
        %v1229 = vld [vmem:[#allocation4 + $0x24] sm:$0xf]
        %v1230 = vld [vmem:[#allocation4 + $0x28] sm:$0xf]
        %v1231 = vld [vmem:[#allocation4 + $0x2c] sm:$0xf]
        %v1232 = vld [vmem:[#allocation4 + $0x30] sm:$0xf]
        %v1233 = vld [vmem:[#allocation4 + $0x34] sm:$0xf]
        %v1234 = vld [vmem:[#allocation4 + $0x38] sm:$0xf]
        %v1235 = vld [vmem:[#allocation4 + $0x3c] sm:$0xf]
        %v1236 = vld [vmem:[#allocation4 + $0x40] sm:$0xf]
        %v1237 = vld [vmem:[#allocation4 + $0x44] sm:$0xf]
        %v1238 = vld [vmem:[#allocation4 + $0x48] sm:$0xf]
        %v1239 = vld [vmem:[#allocation4 + $0x4c] sm:$0xf]
        %v1240 = vld [vmem:[#allocation4 + $0x50] sm:$0xf]
        %v1241 = vld [vmem:[#allocation4 + $0x54] sm:$0xf]
        %v1242 = vld [vmem:[#allocation4 + $0x58] sm:$0xf]
        %v1243 = vld [vmem:[#allocation4 + $0x5c] sm:$0xf]
        %v1244 = vld [vmem:[#allocation4 + $0x60] sm:$0xf]
        %v1245 = vld [vmem:[#allocation4 + $0x64] sm:$0xf]
        %v1246 = vld [vmem:[#allocation4 + $0x68] sm:$0xf]
        %v1247 = vld [vmem:[#allocation4 + $0x6c] sm:$0xf]
        %v1248 = vld [vmem:[#allocation4 + $0x70] sm:$0xf]
        %v1249 = vld [vmem:[#allocation4 + $0x74] sm:$0xf]
        %v1250 = vld [vmem:[#allocation4 + $0x78] sm:$0xf]
        %v1251 = vld [vmem:[#allocation4 + $0x7c] sm:$0xf]
        %v1252 = vld [vmem:[%s6 + $0x2] ss:$0 sm:$0xff]
        %v1285 = vunpack.c.l.b16 %v1220
        %v1286 = vunpack.c.l.b16 %v1221
        %v1287 = vunpack.c.l.b16 %v1222
        %v1288 = vunpack.c.l.b16 %v1223
        %v1289 = vunpack.c.l.b16 %v1224
        %v1290 = vunpack.c.l.b16 %v1225
        %v1291 = vunpack.c.l.b16 %v1226
        %v1292 = vunpack.c.l.b16 %v1227
        %v1293 = vunpack.c.l.b16 %v1228
        %v1294 = vunpack.c.l.b16 %v1229
        %v1295 = vunpack.c.l.b16 %v1230
        %v1296 = vunpack.c.l.b16 %v1231
        %v1297 = vunpack.c.l.b16 %v1232
        %v1298 = vunpack.c.l.b16 %v1233
        %v1299 = vunpack.c.l.b16 %v1234
        %v1300 = vunpack.c.l.b16 %v1235
        %v1301 = vunpack.c.l.b16 %v1236
        %v1302 = vunpack.c.l.b16 %v1237
        %v1303 = vunpack.c.l.b16 %v1238
        %v1304 = vunpack.c.l.b16 %v1239
        %v1305 = vunpack.c.l.b16 %v1240
        %v1306 = vunpack.c.l.b16 %v1241
        %v1307 = vunpack.c.l.b16 %v1242
        %v1308 = vunpack.c.l.b16 %v1243
        %v1309 = vunpack.c.l.b16 %v1244
        %v1310 = vunpack.c.l.b16 %v1245
        %v1311 = vunpack.c.l.b16 %v1246
        %v1312 = vunpack.c.l.b16 %v1247
        %v1313 = vunpack.c.l.b16 %v1248
        %v1314 = vunpack.c.l.b16 %v1249
        %v1315 = vunpack.c.l.b16 %v1250
        %v1316 = vunpack.c.l.b16 %v1251
        %v1317 = vpack.c.b16 %v1286, %v1285
        %v1318 = vpack.c.b16 %v1288, %v1287
        %v1319 = vpack.c.b16 %v1290, %v1289
        %v1320 = vpack.c.b16 %v1292, %v1291
        %v1321 = vpack.c.b16 %v1294, %v1293
        %v1322 = vpack.c.b16 %v1296, %v1295
        %v1323 = vpack.c.b16 %v1298, %v1297
        %v1324 = vpack.c.b16 %v1300, %v1299
        %v1325 = vpack.c.b16 %v1302, %v1301
        %v1326 = vpack.c.b16 %v1304, %v1303
        %v1327 = vpack.c.b16 %v1306, %v1305
        %v1328 = vpack.c.b16 %v1308, %v1307
        %v1329 = vpack.c.b16 %v1310, %v1309
        %v1330 = vpack.c.b16 %v1312, %v1311
        %v1331 = vpack.c.b16 %v1314, %v1313
        %v1332 = vpack.c.b16 %v1316, %v1315
        %1349 = vmatpush.bf16.msra.mxu0 %v1324
        %1350 = vmatpush.bf16.msra.mxu0 %v1323
        %1351 = vmatpush.bf16.msra.mxu0 %v1322
        %1352 = vmatpush.bf16.msra.mxu0 %v1321
        %1353 = vmatpush.bf16.msra.mxu0 %v1320
        %1354 = vmatpush.bf16.msra.mxu0 %v1319
        %1355 = vmatpush.bf16.msra.mxu0 %v1318
        %1356 = vmatpush.bf16.msra.mxu0 %v1317
        %1357 = vmatmul.bf16.gmra.mxu0 %v1216
        %v1358 = vpop.f32.mrf.mxu0
        %v1359 = vadd.f32 %v1252, %v1358
        %v1360 = vpop.f32.mrf.mxu0
        %v1361 = vadd.f32 %v1252, %v1360
        %1362 = vmatmul.bf16.gmra.mxu0 %v1218
        %v1363 = vpop.f32.mrf.mxu0
        %v1364 = vadd.f32 %v1252, %v1363
        %v1365 = vpop.f32.mrf.mxu0
        %v1366 = vadd.f32 %v1252, %v1365
        %1367 = vdwg.mxu0
        %1368 = vmatpush.bf16.msra.mxu0 %v1332
        %1369 = vmatpush.bf16.msra.mxu0 %v1331
        %1370 = vmatpush.bf16.msra.mxu0 %v1330
        %1371 = vmatpush.bf16.msra.mxu0 %v1329
        %1372 = vmatpush.bf16.msra.mxu0 %v1328
        %1373 = vmatpush.bf16.msra.mxu0 %v1327
        %1374 = vmatpush.bf16.msra.mxu0 %v1326
        %1375 = vmatpush.bf16.msra.mxu0 %v1325
        %1376 = vmatmul.bf16.gmra.mxu0 %v1217
        %v1377 = vpop.f32.mrf.mxu0
        %v1378 = vadd.f32 %v1359, %v1377
        %v1379 = vpop.f32.mrf.mxu0
        %v1380 = vadd.f32 %v1361, %v1379
        %1381 = vmatmul.bf16.gmra.mxu0 %v1219
        %v1382 = vpop.f32.mrf.mxu0
        %v1383 = vadd.f32 %v1364, %v1382
        %v1384 = vpop.f32.mrf.mxu0
        %v1385 = vadd.f32 %v1366, %v1384
        %1386 = vdwg.mxu0
        %v1387 = vmin.f32 %v1378, 0.0
        %v1388 = vmin.f32 %v1380, 0.0
        %v1389 = vmin.f32 %v1383, 0.0
        %v1390 = vmin.f32 %v1385, 0.0
        %v1391 = vmul.f32 %v1387, 1.442695
        %v1392 = vpow.pop %v1391
        %v1393 = vmul.f32 %v1388, 1.442695
        %v1394 = vpow.pop %v1393
        %v1395 = vmul.f32 %v1389, 1.442695
        %v1396 = vpow.pop %v1395
        %v1397 = vmul.f32 %v1390, 1.442695
        %v1398 = vpow.pop %v1397
        %v1399 = vsub.f32 %v1392, 1.0
        %v1400 = vsub.f32 %v1394, 1.0
        %v1401 = vsub.f32 %v1396, 1.0
        %v1402 = vsub.f32 %v1398, 1.0
        %v1403 = vmul.f32 %v1399, 1.6732632
        %v1404 = vmul.f32 %v1400, 1.6732632
        %v1405 = vmul.f32 %v1401, 1.6732632
        %v1406 = vmul.f32 %v1402, 1.6732632
        %vm1407 = vcmp.gt.f32.partialorder %v1378, 0.0
        %vm1408 = vcmp.gt.f32.partialorder %v1380, 0.0
        %vm1409 = vcmp.gt.f32.partialorder %v1383, 0.0
        %vm1410 = vcmp.gt.f32.partialorder %v1385, 0.0
        %v1411 = vsel %vm1407, %v1378, %v1403
        %v1412 = vsel %vm1408, %v1380, %v1404
        %v1413 = vsel %vm1409, %v1383, %v1405
        %v1414 = vsel %vm1410, %v1385, %v1406
        %v1415 = vpack.c.bf16 %v1412, %v1411
        %v1416 = vpack.c.bf16 %v1414, %v1413
        %v1417 = vld [vmem:[#allocation6] sm:$0xf]
        %v1418 = vld [vmem:[#allocation6 + $0x4] sm:$0xf]
        %v1419 = vld [vmem:[#allocation6 + $0x8] sm:$0xf]
        %v1420 = vld [vmem:[#allocation6 + $0xc] sm:$0xf]
        %v1421 = vld [vmem:[#allocation6 + $0x10] sm:$0xf]
        %v1422 = vld [vmem:[#allocation6 + $0x14] sm:$0xf]
        %v1423 = vld [vmem:[#allocation6 + $0x18] sm:$0xf]
        %v1424 = vld [vmem:[#allocation6 + $0x1c] sm:$0xf]
        %v1425 = vld [vmem:[#allocation6 + $0x20] sm:$0xf]
        %v1426 = vld [vmem:[#allocation6 + $0x24] sm:$0xf]
        %v1427 = vld [vmem:[#allocation6 + $0x28] sm:$0xf]
        %v1428 = vld [vmem:[#allocation6 + $0x2c] sm:$0xf]
        %v1429 = vld [vmem:[#allocation6 + $0x30] sm:$0xf]
        %v1430 = vld [vmem:[#allocation6 + $0x34] sm:$0xf]
        %v1431 = vld [vmem:[#allocation6 + $0x38] sm:$0xf]
        %v1432 = vld [vmem:[#allocation6 + $0x3c] sm:$0xf]
        %v1433 = vld [vmem:[%s6 + $0x3] ss:$0 sm:$0xff]
        %v1450 = vunpack.c.l.b16 %v1417
        %v1451 = vunpack.c.l.b16 %v1418
        %v1452 = vunpack.c.l.b16 %v1419
        %v1453 = vunpack.c.l.b16 %v1420
        %v1454 = vunpack.c.l.b16 %v1421
        %v1455 = vunpack.c.l.b16 %v1422
        %v1456 = vunpack.c.l.b16 %v1423
        %v1457 = vunpack.c.l.b16 %v1424
        %v1458 = vunpack.c.l.b16 %v1425
        %v1459 = vunpack.c.l.b16 %v1426
        %v1460 = vunpack.c.l.b16 %v1427
        %v1461 = vunpack.c.l.b16 %v1428
        %v1462 = vunpack.c.l.b16 %v1429
        %v1463 = vunpack.c.l.b16 %v1430
        %v1464 = vunpack.c.l.b16 %v1431
        %v1465 = vunpack.c.l.b16 %v1432
        %v1466 = vpack.c.b16 %v1451, %v1450
        %v1467 = vpack.c.b16 %v1453, %v1452
        %v1468 = vpack.c.b16 %v1455, %v1454
        %v1469 = vpack.c.b16 %v1457, %v1456
        %v1470 = vpack.c.b16 %v1459, %v1458
        %v1471 = vpack.c.b16 %v1461, %v1460
        %v1472 = vpack.c.b16 %v1463, %v1462
        %v1473 = vpack.c.b16 %v1465, %v1464
        %1482 = vmatpush.bf16.msra.mxu0 %v1473
        %1483 = vmatpush.bf16.msra.mxu0 %v1472
        %1484 = vmatpush.bf16.msra.mxu0 %v1471
        %1485 = vmatpush.bf16.msra.mxu0 %v1470
        %1486 = vmatpush.bf16.msra.mxu0 %v1469
        %1487 = vmatpush.bf16.msra.mxu0 %v1468
        %1488 = vmatpush.bf16.msra.mxu0 %v1467
        %1489 = vmatpush.bf16.msra.mxu0 %v1466
        %1490 = vmatmul.bf16.gmra.mxu0 %v1415
        %v1491 = vpop.f32.mrf.mxu0
        %v1492 = vadd.f32 %v1433, %v1491
        %v1493 = vpop.f32.mrf.mxu0
        %v1494 = vadd.f32 %v1433, %v1493
        %1495 = vmatmul.bf16.gmra.mxu0 %v1416
        %v1496 = vpop.f32.mrf.mxu0
        %v1497 = vadd.f32 %v1433, %v1496
        %v1498 = vpop.f32.mrf.mxu0
        %v1499 = vadd.f32 %v1433, %v1498
        %1500 = vdwg.mxu0
        %v1501 = vmin.f32 %v1492, 0.0
        %v1502 = vmin.f32 %v1494, 0.0
        %v1503 = vmin.f32 %v1497, 0.0
        %v1504 = vmin.f32 %v1499, 0.0
        %v1505 = vmul.f32 %v1501, 1.442695
        %v1506 = vpow.pop %v1505
        %v1507 = vmul.f32 %v1502, 1.442695
        %v1508 = vpow.pop %v1507
        %v1509 = vmul.f32 %v1503, 1.442695
        %v1510 = vpow.pop %v1509
        %v1511 = vmul.f32 %v1504, 1.442695
        %v1512 = vpow.pop %v1511
        %v1513 = vsub.f32 %v1506, 1.0
        %v1514 = vsub.f32 %v1508, 1.0
        %v1515 = vsub.f32 %v1510, 1.0
        %v1516 = vsub.f32 %v1512, 1.0
        %v1517 = vmul.f32 %v1513, 1.6732632
        %v1518 = vmul.f32 %v1514, 1.6732632
        %v1519 = vmul.f32 %v1515, 1.6732632
        %v1520 = vmul.f32 %v1516, 1.6732632
        %vm1521 = vcmp.gt.f32.partialorder %v1492, 0.0
        %vm1522 = vcmp.gt.f32.partialorder %v1494, 0.0
        %vm1523 = vcmp.gt.f32.partialorder %v1497, 0.0
        %vm1524 = vcmp.gt.f32.partialorder %v1499, 0.0
        %v1525 = vsel %vm1521, %v1492, %v1517
        %v1526 = vsel %vm1522, %v1494, %v1518
        %v1527 = vsel %vm1523, %v1497, %v1519
        %v1528 = vsel %vm1524, %v1499, %v1520
        %v1529 = vpack.c.bf16 %v1526, %v1525
        %v1530 = vpack.c.bf16 %v1528, %v1527
        %v1531 = vld [vmem:[#allocation7] sm:$0xf]
        %v1532 = vld [vmem:[#allocation7 + $0x4] sm:$0xf]
        %v1533 = vld [vmem:[#allocation7 + $0x8] sm:$0xf]
        %v1534 = vld [vmem:[#allocation7 + $0xc] sm:$0xf]
        %v1535 = vld [vmem:[#allocation7 + $0x10] sm:$0xf]
        %v1536 = vld [vmem:[#allocation7 + $0x14] sm:$0xf]
        %v1537 = vld [vmem:[#allocation7 + $0x18] sm:$0xf]
        %v1538 = vld [vmem:[#allocation7 + $0x1c] sm:$0xf]
        %v1539 = vld [vmem:[#allocation7 + $0x20] sm:$0xf]
        %v1540 = vld [vmem:[#allocation7 + $0x24] sm:$0xf]
        %v1541 = vld [vmem:[#allocation7 + $0x28] sm:$0xf]
        %v1542 = vld [vmem:[#allocation7 + $0x2c] sm:$0xf]
        %v1543 = vld [vmem:[#allocation7 + $0x30] sm:$0xf]
        %v1544 = vld [vmem:[#allocation7 + $0x34] sm:$0xf]
        %v1545 = vld [vmem:[#allocation7 + $0x38] sm:$0xf]
        %v1546 = vld [vmem:[#allocation7 + $0x3c] sm:$0xf]
        %v1547 = vld [vmem:[%s6 + $0x4] ss:$0 sm:$0xff]
        %v1564 = vunpack.c.l.b16 %v1531
        %v1565 = vunpack.c.l.b16 %v1532
        %v1566 = vunpack.c.l.b16 %v1533
        %v1567 = vunpack.c.l.b16 %v1534
        %v1568 = vunpack.c.l.b16 %v1535
        %v1569 = vunpack.c.l.b16 %v1536
        %v1570 = vunpack.c.l.b16 %v1537
        %v1571 = vunpack.c.l.b16 %v1538
        %v1572 = vunpack.c.l.b16 %v1539
        %v1573 = vunpack.c.l.b16 %v1540
        %v1574 = vunpack.c.l.b16 %v1541
        %v1575 = vunpack.c.l.b16 %v1542
        %v1576 = vunpack.c.l.b16 %v1543
        %v1577 = vunpack.c.l.b16 %v1544
        %v1578 = vunpack.c.l.b16 %v1545
        %v1579 = vunpack.c.l.b16 %v1546
        %v1580 = vpack.c.b16 %v1565, %v1564
        %v1581 = vpack.c.b16 %v1567, %v1566
        %v1582 = vpack.c.b16 %v1569, %v1568
        %v1583 = vpack.c.b16 %v1571, %v1570
        %v1584 = vpack.c.b16 %v1573, %v1572
        %v1585 = vpack.c.b16 %v1575, %v1574
        %v1586 = vpack.c.b16 %v1577, %v1576
        %v1587 = vpack.c.b16 %v1579, %v1578
        %1596 = vmatpush.bf16.msra.mxu0 %v1587
        %1597 = vmatpush.bf16.msra.mxu0 %v1586
        %1598 = vmatpush.bf16.msra.mxu0 %v1585
        %1599 = vmatpush.bf16.msra.mxu0 %v1584
        %1600 = vmatpush.bf16.msra.mxu0 %v1583
        %1601 = vmatpush.bf16.msra.mxu0 %v1582
        %1602 = vmatpush.bf16.msra.mxu0 %v1581
        %1603 = vmatpush.bf16.msra.mxu0 %v1580
        %1604 = vmatmul.bf16.gmra.mxu0 %v1529
        %v1605 = vpop.f32.mrf.mxu0
        %v1606 = vadd.f32 %v1547, %v1605
        %v1607 = vpop.f32.mrf.mxu0
        %v1608 = vadd.f32 %v1547, %v1607
        %1609 = vmatmul.bf16.gmra.mxu0 %v1530
        %v1610 = vpop.f32.mrf.mxu0
        %v1611 = vadd.f32 %v1547, %v1610
        %v1612 = vpop.f32.mrf.mxu0
        %v1613 = vadd.f32 %v1547, %v1612
        %1614 = vdwg.mxu0
        %v1615 = vsub.f32 0.0, %v1606
        %v1616 = vsub.f32 0.0, %v1608
        %v1617 = vsub.f32 0.0, %v1611
        %v1618 = vsub.f32 0.0, %v1613
        %v1619 = vmul.f32 %v1615, 1.442695
        %v1620 = vpow.pop %v1619
        %v1621 = vmul.f32 %v1616, 1.442695
        %v1622 = vpow.pop %v1621
        %v1623 = vmul.f32 %v1617, 1.442695
        %v1624 = vpow.pop %v1623
        %v1625 = vmul.f32 %v1618, 1.442695
        %v1626 = vpow.pop %v1625
        %v1627 = vadd.f32 %v1620, 1.0
        %v1628 = vadd.f32 %v1622, 1.0
        %v1629 = vadd.f32 %v1624, 1.0
        %v1630 = vadd.f32 %v1626, 1.0
        %v1631 = vrcp.pop %v1627
        %v1632 = vmul.f32 %v1627, %v1631
        %v1633 = vsub.f32 1.0, %v1632
        %v1634 = vmul.f32 %v1631, %v1633
        %v1635 = vadd.f32 %v1631, %v1634
        %vm1636 = vweird.f32 %v1627
        %vm1637 = vweird.f32 %v1631
        %vm1638 = vmor %vm1636, %vm1637
        %v1639 = vsel %vm1638, %v1631, %v1635
        %v1640 = vand.u32 2147483647, %v1627
        %vm1641 = vcmp.eq.f32.partialorder %v1640, 8.507059e+37
        %v1642 = vand.u32 %v1627, 2147483648
        %v1643 = vor.u32 1.1754944e-38, %v1642
        %v1644 = vsel %vm1641, %v1643, %v1639
        %v1645 = vrcp.pop %v1628
        %v1646 = vmul.f32 %v1628, %v1645
        %v1647 = vsub.f32 1.0, %v1646
        %v1648 = vmul.f32 %v1645, %v1647
        %v1649 = vadd.f32 %v1645, %v1648
        %vm1650 = vweird.f32 %v1628
        %vm1651 = vweird.f32 %v1645
        %vm1652 = vmor %vm1650, %vm1651
        %v1653 = vsel %vm1652, %v1645, %v1649
        %v1654 = vand.u32 2147483647, %v1628
        %vm1655 = vcmp.eq.f32.partialorder %v1654, 8.507059e+37
        %v1656 = vand.u32 %v1628, 2147483648
        %v1657 = vor.u32 1.1754944e-38, %v1656
        %v1658 = vsel %vm1655, %v1657, %v1653
        %v1659 = vrcp.pop %v1629
        %v1660 = vmul.f32 %v1629, %v1659
        %v1661 = vsub.f32 1.0, %v1660
        %v1662 = vmul.f32 %v1659, %v1661
        %v1663 = vadd.f32 %v1659, %v1662
        %vm1664 = vweird.f32 %v1629
        %vm1665 = vweird.f32 %v1659
        %vm1666 = vmor %vm1664, %vm1665
        %v1667 = vsel %vm1666, %v1659, %v1663
        %v1668 = vand.u32 2147483647, %v1629
        %vm1669 = vcmp.eq.f32.partialorder %v1668, 8.507059e+37
        %v1670 = vand.u32 %v1629, 2147483648
        %v1671 = vor.u32 1.1754944e-38, %v1670
        %v1672 = vsel %vm1669, %v1671, %v1667
        %v1673 = vrcp.pop %v1630
        %v1674 = vmul.f32 %v1630, %v1673
        %v1675 = vsub.f32 1.0, %v1674
        %v1676 = vmul.f32 %v1673, %v1675
        %v1677 = vadd.f32 %v1673, %v1676
        %vm1678 = vweird.f32 %v1630
        %vm1679 = vweird.f32 %v1673
        %vm1680 = vmor %vm1678, %vm1679
        %v1681 = vsel %vm1680, %v1673, %v1677
        %v1682 = vand.u32 2147483647, %v1630
        %vm1683 = vcmp.eq.f32.partialorder %v1682, 8.507059e+37
        %v1684 = vand.u32 %v1630, 2147483648
        %v1685 = vor.u32 1.1754944e-38, %v1684
        %v1686 = vsel %vm1683, %v1685, %v1681
        %vm1687 = vcmask 130048
        %1688 = vst.msk [vmem:[%s347] sm:$0xff] %vm1687, %v1644
        %1689 = vst.msk [vmem:[%s347 + $0x8] sm:$0xff] %vm1687, %v1658
        %1690 = vst.msk [vmem:[%s347 + $0x10] sm:$0xff] %vm1687, %v1672
        %1691 = vst.msk [vmem:[%s347 + $0x18] sm:$0xff] %vm1687, %v1686
        %s1692 = smul.u32 4, %s21
        %p1693 = scmp.lt.s32.totalorder %s1692, 7
        %s1694 = scalar_select %p1693, %s1692, 7
        %s1695 = smul.addr %s1694, 8
        %s1696 = scalar_lea.vmem %s7, %s1695
        // Predicated region
        $region65: #{tpu_custom_call.1} parent=47 // pred_check
          %p1697 = pneg %p191
        $region66: #{tpu_custom_call.1} parent=47 // pred_check_branch
          %1699 = sbr.rel (%p1697) target = $region68
        $region67: #{tpu_custom_call.1} parent=47 // pred_region
          %s1700 = smul.u32 4, %s21
        $region68: #{tpu_custom_call.1} parent=47 // pred_fallthru
          _
      $region48: #{tpu_custom_call.1} parent=5 // pred_fallthru
        _
      %p1701 = scmp.le.s32.totalorder 2, %s16
      // Predicated region
      $region69: #{tpu_custom_call.1} parent=5 // pred_check
        %p1702 = pneg %p1701
      $region70: #{tpu_custom_call.1} parent=5 // pred_check_branch
        %1704 = sbr.rel (%p1702) target = $region72
      $region71: #{tpu_custom_call.1} parent=5 // pred_region
        %s1705 = ssub.s32 %s16, 2
        // Predicated region
        $region73: #{tpu_custom_call.1} parent=71 // pred_check
          %p1706 = pneg %p197
        $region74: #{tpu_custom_call.1} parent=71 // pred_check_branch
          %1708 = sbr.rel (%p1706) target = $region76
        $region75: #{tpu_custom_call.1} parent=71 // pred_region
          %s1709 = smul.u32 4, %s22
          %p1710 = scmp.lt.s32.totalorder %s1709, 7
          %s1711 = scalar_select %p1710, %s1709, 7
          %s1712 = smul.addr %s1711, 8
          %s1713 = scalar_lea.vmem %s7, %s1712
        $region76: #{tpu_custom_call.1} parent=71 // pred_fallthru
          _
      $region72: #{tpu_custom_call.1} parent=5 // pred_fallthru
        _
    $region6: #{tpu_custom_call.1} parent=1 // loop_footer
      %s20 = sadd.s32 1, %s16
    $region7: #{tpu_custom_call.1} parent=1 // loop_footer_branch
      %15 = sbr.rel target = $region3
    $region8: #{tpu_custom_call.1} parent=1 // loop_exit
      _
    %1714 = vsyncpa [#allocation3], 1
    %s1715 = scalar_lea.sflag [#allocation3], 1
    %1716 = vsyncpa %s1715, 1
    %1717 = vsyncpa [#allocation5], 1
    %1718 = vsyncpa [#allocation8], 1

</llo_original>
